<compile_context>
chip_gen: v7x
topology: tpu7x:2x2x1
jax: 0.10.0
libtpu: 0.0.40
codegen_flags: <defaults>
</compile_context>

<pallas_src>
import functools

import jax
import jax.numpy as jnp
from jax.experimental import pallas as pl
from jax.experimental.pallas import tpu as pltpu


HIDDEN = 512                 # fixed by the module (conv1 out channels)
H_CHUNK = 128                # hidden-dim chunk: only (128, T) of h live at a time
N_CHUNKS = HIDDEN // H_CHUNK


# ---------------------------------------------------------------------------
# GradientScalarLayer: identity forward, scaled gradient backward.
# ---------------------------------------------------------------------------
@functools.partial(jax.custom_vjp, nondiff_argnums=(1,))
def gradient_scalar(x, scale):
    return x


def _gs_fwd(x, scale):
    return x, None


def _gs_bwd(scale, _, g):
    return (scale * g,)


gradient_scalar.defvjp(_gs_fwd, _gs_bwd)


# ---------------------------------------------------------------------------
# Kernel
# ---------------------------------------------------------------------------
def _da_img_head_kernel(x_ref, w1_ref, b1_ref, w2_ref, b2_ref, o_ref):
    # x_ref : (1, C, T)   f32   raw input tile (pixels on lanes)
    # w1_ref: (512, C)    bf16  resident (constant index_map)
    # b1_ref: (512, 1)    f32   resident
    # w2_ref: (1, 512)    bf16  resident
    # b2_ref: (1, 1)      f32   SMEM scalar
    # o_ref : (1, 1, T)   f32   lane-dense output block
    x = x_ref[0].astype(jnp.bfloat16)                         # in-kernel cast (C, T)
    acc = jnp.zeros((1, x.shape[1]), dtype=jnp.float32)       # (1, T)
    for k in range(N_CHUNKS):                                 # 4 static chunks of 128
        lo = k * H_CHUNK
        hi = lo + H_CHUNK
        h = jnp.dot(w1_ref[lo:hi, :], x,
                    preferred_element_type=jnp.float32)       # (128, T) f32 acc
        h = jnp.maximum(h + b1_ref[lo:hi, :], 0.0).astype(jnp.bfloat16)
        acc = acc + jnp.dot(w2_ref[:, lo:hi], h,
                            preferred_element_type=jnp.float32)
    o_ref[0] = (acc + b2_ref[0, 0]).astype(o_ref.dtype)


# ---------------------------------------------------------------------------
# Tiling / VMEM budgeting
# ---------------------------------------------------------------------------
def _round_up(x, m):
    return ((x + m - 1) // m) * m


def _cdiv(a, b):
    return (a + b - 1) // b


def _vmem_capacity_bytes():
    try:
        return int(pltpu.get_tpu_info().vmem_capacity_bytes)
    except Exception:
        return 64 << 20  # conservative fallback (v7x per-TC VMEM)


def _vmem_footprint_bytes(c, t_pix):
    """Worst-case VMEM of one grid step (pipelined buffers + intermediates)."""
    c8 = _round_up(max(c, 8), 8)
    c128 = _round_up(max(c, 128), 128)
    x_tile = 2 * c8 * t_pix * 4        # f32 input tile, double-buffered
    x_bf16 = c8 * t_pix * 2            # in-kernel bf16 copy of the tile
    h_bf16 = HIDDEN * t_pix * 2        # intermediate chunks (worst case all live)
    o_tile = 2 * 8 * t_pix * 4         # f32 output tile (sublane-padded), 2 buffers
    w1 = 2 * HIDDEN * c128 * 2         # bf16 W1
    b1 = 2 * HIDDEN * 128 * 4          # (512,1) f32 lane-pads to (512,128)
    w2 = 2 * 8 * HIDDEN * 2            # (1,512) bf16 sublane-pads to (8,512)
    return x_tile + x_bf16 + h_bf16 + o_tile + w1 + b1 + w2


def _choose_t_pix(c, hw, n, tm, vmem_cap):
    hw_pad = _round_up(hw, 128)
    # Upper bound: user override or 4096 lanes; never more than the padded image.
    cap = _round_up(max(tm, 128), 128) if tm is not None else 4096
    t = max(128, min(hw_pad, cap))
    # Shrink until the worst-case footprint fits in ~65% of this chip's VMEM.
    budget = int(0.65 * vmem_cap)
    while t > 128 and _vmem_footprint_bytes(c, t) > budget:
        t -= 128
    # Keep enough grid steps to feed both TensorCores on v7x (~8 steps), but
    # never drop below 512 lanes (per-step overhead regime).
    min_steps = 8
    if n * _cdiv(hw, t) < min_steps:
        blocks = max(1, _cdiv(min_steps, n))
        t_alt = _round_up(_cdiv(hw_pad, blocks), 128)
        t = min(t, max(t_alt, min(512, hw_pad)))
    return max(128, t)


def _vmem_limit_bytes(c, t_pix, vmem_cap):
    limit = _vmem_footprint_bytes(c, t_pix) + (12 << 20)  # headroom for compiler scratch
    limit = max(limit, 16 << 20)
    return int(min(limit, int(0.9 * vmem_cap)))


# ---------------------------------------------------------------------------
# Forward wrapper
# ---------------------------------------------------------------------------
def da_img_head_forward(x_nchw, w1, b1, w2, b2, *, grad_scale=-1.0, tm=None):
    """x_nchw: (N, C, H, W) float32. Returns (N, 1, H, W) float32.

    w1: (512, C) -- PyTorch conv1.weight (512, C, 1, 1) squeezed.
    b1: (512,)
    w2: (1, 512) -- PyTorch conv2.weight (1, 512, 1, 1) squeezed.
    b2: (1,)
    tm: optional pixel-tile override (lanes); rounded to a multiple of 128.
    """
    n, c, h, w = x_nchw.shape
    hw = h * w

    # GradientScalarLayer: identity in the forward pass.
    # TODO(synk): backward through pallas_call itself is not defined; only the
    # GRL gradient scaling is wired via custom_vjp (this head is forward-only).
    x_nchw = gradient_scalar(x_nchw, float(grad_scale))

    vmem_cap = _vmem_capacity_bytes()
    t_pix = _choose_t_pix(c, hw, n, tm, vmem_cap)

    # NCHW-native flatten only — no pad, no host-side cast.
    x_flat = x_nchw.reshape(n, c, hw)

    w1_b = w1.astype(jnp.bfloat16)                      # (512, C)
    b1_2d = b1.reshape(HIDDEN, 1).astype(jnp.float32)   # (512, 1)
    w2_b = w2.reshape(1, HIDDEN).astype(jnp.bfloat16)   # (1, 512)
    b2_2d = b2.reshape(1, 1).astype(jnp.float32)        # (1, 1) -> SMEM scalar

    # Ragged last pixel block is fine: no cross-pixel reduction in this head.
    grid = (n, _cdiv(hw, t_pix))

    out_flat = pl.pallas_call(
        _da_img_head_kernel,
        out_shape=jax.ShapeDtypeStruct((n, 1, hw), jnp.float32),
        grid_spec=pltpu.PrefetchScalarGridSpec(
            num_scalar_prefetch=0,
            grid=grid,
            in_specs=[
                pl.BlockSpec((1, c, t_pix), lambda i, p: (i, 0, p)),   # x tile (f32)
                pl.BlockSpec((HIDDEN, c), lambda i, p: (0, 0)),        # W1 (resident)
                pl.BlockSpec((HIDDEN, 1), lambda i, p: (0, 0)),        # b1 (resident)
                pl.BlockSpec((1, HIDDEN), lambda i, p: (0, 0)),        # W2 (resident)
                pl.BlockSpec(memory_space=pltpu.MemorySpace.SMEM),     # b2 scalar
            ],
            out_specs=pl.BlockSpec((1, 1, t_pix), lambda i, p: (i, 0, p)),
        ),
        compiler_params=pltpu.CompilerParams(
            dimension_semantics=("parallel", "parallel"),
            vmem_limit_bytes=_vmem_limit_bytes(c, t_pix, vmem_cap),
        ),
    )(x_flat, w1_b, b1_2d, w2_b, b2_2d)

    # Pure reshape — no transpose, no slice (output was never padded).
    return out_flat.reshape(n, 1, h, w)


# ---------------------------------------------------------------------------
# Params / reference
# ---------------------------------------------------------------------------
def init_params(key, in_channels):
    """Matches the module init: normal(std=0.001) weights, zero bias."""
    k1, k2 = jax.random.split(key)
    w1 = 0.001 * jax.random.normal(k1, (HIDDEN, in_channels), dtype=jnp.float32)
    b1 = jnp.zeros((HIDDEN,), dtype=jnp.float32)
    w2 = 0.001 * jax.random.normal(k2, (1, HIDDEN), dtype=jnp.float32)
    b2 = jnp.zeros((1,), dtype=jnp.float32)
    return w1, b1, w2, b2


def _reference(x_nchw, w1, b1, w2, b2):
    # Pure-JAX f32 reference: 1x1 convs are channel contractions (NCHW-native).
    h = jnp.einsum("oc,nchw->nohw", w1, x_nchw) + b1[None, :, None, None]
    h = jnp.maximum(h, 0.0)
    o = jnp.einsum("oc,nchw->nohw", w2, h) + b2[None, :, None, None]
    return o


if __name__ == "__main__":
    key = jax.random.PRNGKey(0)
    kx, kp = jax.random.split(key)

    N, C, H, W = 2, 4, 16, 16
    x = jax.random.normal(kx, (N, C, H, W), dtype=jnp.float32)
    w1, b1, w2, b2 = init_params(kp, C)

    out = da_img_head_forward(x, w1, b1, w2, b2)
    out = jax.block_until_ready(out)

    ref = _reference(x, w1, b1, w2, b2)
    assert out.shape == (N, 1, H, W), out.shape
    err = float(jnp.max(jnp.abs(out - ref)))
    scale = float(jnp.max(jnp.abs(ref)))
    # bf16 MXU operands (x, W1, h, W2) with f32 accumulation.
    assert err <= 2e-6 + 2e-2 * scale, (
        f"mismatch vs reference: max abs diff {err:e} (ref max {scale:e})"
    )

    print("KERNEL_OK")
</pallas_src>

<mosaic_0001>
module attributes {stable_mosaic.version = 11 : i64} {
  func.func @_da_img_head_kernel(%arg0: i32, %arg1: i32, %arg2: memref<1x4x256xf32, #tpu.memory_space<vmem>>, %arg3: memref<512x4xbf16, #tpu.memory_space<vmem>>, %arg4: memref<512x1xf32, #tpu.memory_space<vmem>>, %arg5: memref<1x512xbf16, #tpu.memory_space<vmem>>, %arg6: memref<1x1xf32, #tpu.memory_space<smem>>, %arg7: memref<1x1x256xf32, #tpu.memory_space<vmem>>) attributes {dimension_semantics = [#tpu.dimension_semantics<parallel>, #tpu.dimension_semantics<parallel>], iteration_bounds = array<i64: 2, 1>, scalar_prefetch = 0 : i64, scratch_operands = 0 : i64, tpu.core_type = #tpu.core_type<tc>, window_params = [{transform_indices = @transform_0, window_bounds = array<i64: 1, 4, 256>}, {pipeline_mode = #tpu.pipeline_mode<synchronous>, transform_indices = @transform_1, window_bounds = array<i64: 512, 4>}, {pipeline_mode = #tpu.pipeline_mode<synchronous>, transform_indices = @transform_2, window_bounds = array<i64: 512, 1>}, {pipeline_mode = #tpu.pipeline_mode<synchronous>, transform_indices = @transform_3, window_bounds = array<i64: 1, 512>}, {transform_indices = @transform_4, window_bounds = array<i64: 1, 1>}, {transform_indices = @transform_5, window_bounds = array<i64: 1, 1, 256>}]} {
    %c0 = arith.constant 0 : index
    %c0_0 = arith.constant 0 : index
    %c0_1 = arith.constant 0 : index
    %0 = vector.load %arg2[%c0, %c0_0, %c0_1] : memref<1x4x256xf32, #tpu.memory_space<vmem>>, vector<1x4x256xf32>
    %1 = vector.shape_cast %0 : vector<1x4x256xf32> to vector<4x256xf32>
    %2 = arith.truncf %1 : vector<4x256xf32> to vector<4x256xbf16>
    %cst = arith.constant 0.000000e+00 : f32
    %3 = vector.broadcast %cst : f32 to vector<1x256xf32>
    %c0_2 = arith.constant 0 : index
    %c0_3 = arith.constant 0 : index
    %4 = vector.load %arg3[%c0_2, %c0_3] : memref<512x4xbf16, #tpu.memory_space<vmem>>, vector<128x4xbf16>
    %cst_4 = arith.constant dense<0.000000e+00> : vector<128x256xf32>
    %5 = tpu.matmul %4, %2, %cst_4 {dimension_numbers = #tpu.dot_dimension_numbers<[1], [0], [0], [1], [0, 0, 1, 1], [], []>} : vector<128x4xbf16>, vector<4x256xbf16>, vector<128x256xf32> -> vector<128x256xf32>
    %c0_5 = arith.constant 0 : index
    %c0_6 = arith.constant 0 : index
    %6 = vector.load %arg4[%c0_5, %c0_6] : memref<512x1xf32, #tpu.memory_space<vmem>>, vector<128x1xf32>
    %7 = vector.broadcast %6 : vector<128x1xf32> to vector<128x256xf32>
    %8 = arith.addf %5, %7 : vector<128x256xf32>
    %cst_7 = arith.constant 0.000000e+00 : f32
    %9 = vector.broadcast %cst_7 : f32 to vector<128x256xf32>
    %10 = arith.maximumf %8, %9 : vector<128x256xf32>
    %11 = arith.truncf %10 : vector<128x256xf32> to vector<128x256xbf16>
    %c0_8 = arith.constant 0 : index
    %c0_9 = arith.constant 0 : index
    %12 = vector.load %arg5[%c0_8, %c0_9] : memref<1x512xbf16, #tpu.memory_space<vmem>>, vector<1x128xbf16>
    %cst_10 = arith.constant dense<0.000000e+00> : vector<1x256xf32>
    %13 = tpu.matmul %12, %11, %cst_10 {dimension_numbers = #tpu.dot_dimension_numbers<[1], [0], [0], [1], [0, 0, 1, 1], [], []>} : vector<1x128xbf16>, vector<128x256xbf16>, vector<1x256xf32> -> vector<1x256xf32>
    %14 = arith.addf %3, %13 : vector<1x256xf32>
    %c128 = arith.constant 128 : index
    %c0_11 = arith.constant 0 : index
    %15 = vector.load %arg3[%c128, %c0_11] : memref<512x4xbf16, #tpu.memory_space<vmem>>, vector<128x4xbf16>
    %cst_12 = arith.constant dense<0.000000e+00> : vector<128x256xf32>
    %16 = tpu.matmul %15, %2, %cst_12 {dimension_numbers = #tpu.dot_dimension_numbers<[1], [0], [0], [1], [0, 0, 1, 1], [], []>} : vector<128x4xbf16>, vector<4x256xbf16>, vector<128x256xf32> -> vector<128x256xf32>
    %c128_13 = arith.constant 128 : index
    %c0_14 = arith.constant 0 : index
    %17 = vector.load %arg4[%c128_13, %c0_14] : memref<512x1xf32, #tpu.memory_space<vmem>>, vector<128x1xf32>
    %18 = vector.broadcast %17 : vector<128x1xf32> to vector<128x256xf32>
    %19 = arith.addf %16, %18 : vector<128x256xf32>
    %cst_15 = arith.constant 0.000000e+00 : f32
    %20 = vector.broadcast %cst_15 : f32 to vector<128x256xf32>
    %21 = arith.maximumf %19, %20 : vector<128x256xf32>
    %22 = arith.truncf %21 : vector<128x256xf32> to vector<128x256xbf16>
    %c0_16 = arith.constant 0 : index
    %c128_17 = arith.constant 128 : index
    %23 = vector.load %arg5[%c0_16, %c128_17] : memref<1x512xbf16, #tpu.memory_space<vmem>>, vector<1x128xbf16>
    %cst_18 = arith.constant dense<0.000000e+00> : vector<1x256xf32>
    %24 = tpu.matmul %23, %22, %cst_18 {dimension_numbers = #tpu.dot_dimension_numbers<[1], [0], [0], [1], [0, 0, 1, 1], [], []>} : vector<1x128xbf16>, vector<128x256xbf16>, vector<1x256xf32> -> vector<1x256xf32>
    %25 = arith.addf %14, %24 : vector<1x256xf32>
    %c256 = arith.constant 256 : index
    %c0_19 = arith.constant 0 : index
    %26 = vector.load %arg3[%c256, %c0_19] : memref<512x4xbf16, #tpu.memory_space<vmem>>, vector<128x4xbf16>
    %cst_20 = arith.constant dense<0.000000e+00> : vector<128x256xf32>
    %27 = tpu.matmul %26, %2, %cst_20 {dimension_numbers = #tpu.dot_dimension_numbers<[1], [0], [0], [1], [0, 0, 1, 1], [], []>} : vector<128x4xbf16>, vector<4x256xbf16>, vector<128x256xf32> -> vector<128x256xf32>
    %c256_21 = arith.constant 256 : index
    %c0_22 = arith.constant 0 : index
    %28 = vector.load %arg4[%c256_21, %c0_22] : memref<512x1xf32, #tpu.memory_space<vmem>>, vector<128x1xf32>
    %29 = vector.broadcast %28 : vector<128x1xf32> to vector<128x256xf32>
    %30 = arith.addf %27, %29 : vector<128x256xf32>
    %cst_23 = arith.constant 0.000000e+00 : f32
    %31 = vector.broadcast %cst_23 : f32 to vector<128x256xf32>
    %32 = arith.maximumf %30, %31 : vector<128x256xf32>
    %33 = arith.truncf %32 : vector<128x256xf32> to vector<128x256xbf16>
    %c0_24 = arith.constant 0 : index
    %c256_25 = arith.constant 256 : index
    %34 = vector.load %arg5[%c0_24, %c256_25] : memref<1x512xbf16, #tpu.memory_space<vmem>>, vector<1x128xbf16>
    %cst_26 = arith.constant dense<0.000000e+00> : vector<1x256xf32>
    %35 = tpu.matmul %34, %33, %cst_26 {dimension_numbers = #tpu.dot_dimension_numbers<[1], [0], [0], [1], [0, 0, 1, 1], [], []>} : vector<1x128xbf16>, vector<128x256xbf16>, vector<1x256xf32> -> vector<1x256xf32>
    %36 = arith.addf %25, %35 : vector<1x256xf32>
    %c384 = arith.constant 384 : index
    %c0_27 = arith.constant 0 : index
    %37 = vector.load %arg3[%c384, %c0_27] : memref<512x4xbf16, #tpu.memory_space<vmem>>, vector<128x4xbf16>
    %cst_28 = arith.constant dense<0.000000e+00> : vector<128x256xf32>
    %38 = tpu.matmul %37, %2, %cst_28 {dimension_numbers = #tpu.dot_dimension_numbers<[1], [0], [0], [1], [0, 0, 1, 1], [], []>} : vector<128x4xbf16>, vector<4x256xbf16>, vector<128x256xf32> -> vector<128x256xf32>
    %c384_29 = arith.constant 384 : index
    %c0_30 = arith.constant 0 : index
    %39 = vector.load %arg4[%c384_29, %c0_30] : memref<512x1xf32, #tpu.memory_space<vmem>>, vector<128x1xf32>
    %40 = vector.broadcast %39 : vector<128x1xf32> to vector<128x256xf32>
    %41 = arith.addf %38, %40 : vector<128x256xf32>
    %cst_31 = arith.constant 0.000000e+00 : f32
    %42 = vector.broadcast %cst_31 : f32 to vector<128x256xf32>
    %43 = arith.maximumf %41, %42 : vector<128x256xf32>
    %44 = arith.truncf %43 : vector<128x256xf32> to vector<128x256xbf16>
    %c0_32 = arith.constant 0 : index
    %c384_33 = arith.constant 384 : index
    %45 = vector.load %arg5[%c0_32, %c384_33] : memref<1x512xbf16, #tpu.memory_space<vmem>>, vector<1x128xbf16>
    %cst_34 = arith.constant dense<0.000000e+00> : vector<1x256xf32>
    %46 = tpu.matmul %45, %44, %cst_34 {dimension_numbers = #tpu.dot_dimension_numbers<[1], [0], [0], [1], [0, 0, 1, 1], [], []>} : vector<1x128xbf16>, vector<128x256xbf16>, vector<1x256xf32> -> vector<1x256xf32>
    %47 = arith.addf %36, %46 : vector<1x256xf32>
    %c0_35 = arith.constant 0 : index
    %c0_36 = arith.constant 0 : index
    %48 = memref.load %arg6[%c0_35, %c0_36] : memref<1x1xf32, #tpu.memory_space<smem>>
    %49 = vector.broadcast %48 : f32 to vector<1x256xf32>
    %50 = arith.addf %47, %49 : vector<1x256xf32>
    %c0_37 = arith.constant 0 : index
    %c0_38 = arith.constant 0 : index
    %c0_39 = arith.constant 0 : index
    %51 = vector.load %arg7[%c0_37, %c0_38, %c0_39] : memref<1x1x256xf32, #tpu.memory_space<vmem>>, vector<1x1x256xf32>
    %52 = vector.shape_cast %51 : vector<1x1x256xf32> to vector<1x256xf32>
    %53 = vector.shape_cast %50 : vector<1x256xf32> to vector<1x1x256xf32>
    tpu.vector_store %arg7[%c0_37, %c0_38, %c0_39], %53 {strides = array<i32>} : memref<1x1x256xf32, #tpu.memory_space<vmem>>, vector<1x1x256xf32>,
    return
  }
  func.func @transform_0(%arg0: i32, %arg1: i32) -> (i32, i32, i32) {
    %c0_i32 = arith.constant 0 : i32
    %c0_i32_0 = arith.constant 0 : i32
    return %arg0, %c0_i32, %arg1 : i32, i32, i32
  }
  func.func @transform_1(%arg0: i32, %arg1: i32) -> (i32, i32) {
    %c0_i32 = arith.constant 0 : i32
    %c0_i32_0 = arith.constant 0 : i32
    %c0_i32_1 = arith.constant 0 : i32
    return %c0_i32, %c0_i32_0 : i32, i32
  }
  func.func @transform_2(%arg0: i32, %arg1: i32) -> (i32, i32) {
    %c0_i32 = arith.constant 0 : i32
    %c0_i32_0 = arith.constant 0 : i32
    %c0_i32_1 = arith.constant 0 : i32
    return %c0_i32, %c0_i32_0 : i32, i32
  }
  func.func @transform_3(%arg0: i32, %arg1: i32) -> (i32, i32) {
    %c0_i32 = arith.constant 0 : i32
    %c0_i32_0 = arith.constant 0 : i32
    %c0_i32_1 = arith.constant 0 : i32
    return %c0_i32, %c0_i32_0 : i32, i32
  }
  func.func @transform_4(%arg0: i32, %arg1: i32) -> (i32, i32) {
    %c0_i32 = arith.constant 0 : i32
    %c0_i32_0 = arith.constant 0 : i32
    %c0_i32_1 = arith.constant 0 : i32
    return %c0_i32, %c0_i32_0 : i32, i32
  }
  func.func @transform_5(%arg0: i32, %arg1: i32) -> (i32, i32, i32) {
    %c0_i32 = arith.constant 0 : i32
    %c0_i32_0 = arith.constant 0 : i32
    return %arg0, %c0_i32, %arg1 : i32, i32, i32
  }
}

</mosaic_0001>

<llo_original>
// kernel: tpu_custom_call.1
$region0: #{tpu_custom_call.1}
  #allocation0 [shape = 'u32[]', space=smem, size = 0x4, offset = 0x4, fixed_abs, tag = 'smem constant byte address 0x4 - core index']
  #allocation1 [shape = 'u32[144,128]{1,0:T(1,128)}', space=vmem, size = 0x12000, scoped, tag = 'internal scratch']
  #allocation2 [shape = 'f32[1,1]{1,0:T(1,128)S(6)}', space=smem, size = 0x200, scoped, tag = 'scoped memory for tpu_custom_call.1']
  %s0 = inlined_call_operand.vmem [shape: f32[2,4,256], index: 0, kind: input, shape index: {}]
  %s1 = inlined_call_operand.vmem [shape: bf16[512,4], index: 1, kind: input, shape index: {}]
  %s2 = inlined_call_operand.vmem [shape: f32[512,1], index: 2, kind: input, shape index: {}]
  %s3 = inlined_call_operand.vmem [shape: bf16[1,512], index: 3, kind: input, shape index: {}]
  %s4 = inlined_call_operand.<no memory space> [shape: f32[1,1], index: 4, kind: input, shape index: {}]
  %s5 = inlined_call_operand.hbm [shape: f32[2,1,256], index: 5, kind: output, shape index: {}]
  %s6 = sld [smem:[#allocation0]]
  $region53: #{tpu_custom_call.1} parent=0
    _
  %s8 = ssub.s32 1, %s6
  %s9 = scalar_select 0, %s8, %s6
  %10 = sst [smem:[#allocation2]] %s4
  $region1: #{tpu_custom_call.1} parent=0
    #allocation3 [shape = 'u8[2048]{0}', space=vmem, size = 0x800, scoped, tag = 'output window, operand 0']
    #allocation4 [shape = 's32[2]{0}', space=sflag, size = 0x8, scoped, tag = 'scoped memory for tpu_custom_call.1']
    %11 = vsyncpa [#allocation4], 0
    %s12 = scalar_lea.sflag [#allocation4], 1
    %13 = vsyncpa %s12, 0
    loop: start=0, step=1, limit=4
    $region2: #{tpu_custom_call.1} parent=1 // loop_pre_header
      _
    $region3: #{tpu_custom_call.1} parent=1 // loop_header
      %s15 = sphi 0, %s19
      %p16 = scmp.ge.s32.totalorder %s15, 4
      %s22 = sphi 0, %s34
      %s23 = sphi 0, %s30
      %s24 = sphi 0, %s22
      %s25 = sphi 0, %s23
      %s26 = sphi 0, %s24
      %s27 = sphi 0, %s25
      %s39 = sphi 0, %s41
      %s42 = sphi 0, %s39
      %s43 = sphi 0, %s42
      %s59 = sphi 0, %s43
      %s63 = sphi 0, %s63
      %s65 = sphi 0, %s63
      %s66 = sphi 0, %s65
      %s80 = sphi 0, %s66
      %s84 = sphi 0, %s84
      %s86 = sphi 0, %s84
      %s87 = sphi 0, %s86
      %s101 = sphi 0, %s87
      %s105 = sphi 0, %s105
      %s107 = sphi 0, %s105
      %s108 = sphi 0, %s107
      %s122 = sphi 0, %s108
      %s126 = sphi 0, %s126
      %s128 = sphi 0, %s126
      %s129 = sphi 0, %s128
      %s143 = sphi 0, %s129
      %s151 = sphi 0, %s153
      %s154 = sphi 0, %s151
      %s155 = sphi 0, %s154
      %s171 = sphi 0, %s155
    $region4: #{tpu_custom_call.1} parent=1 // loop_header_branch
      %18 = sbr.rel (%p16) target = $region8
    $region5: #{tpu_custom_call.1} parent=1 // loop_body
      %s20 = ssub.s32 %s15, 1
      %s21 = ssub.s32 %s15, 2
      %s28 = sadd.s32 1, %s23
      %p29 = scmp.ge.s32.totalorder %s28, 1
      %s30 = scalar_select %p29, 0, %s28
      %s31 = sadd.s32 1, %s22
      %s32 = scalar_select %p29, %s31, %s22
      %p33 = scmp.ge.s32.totalorder %s32, 2
      %s34 = scalar_select %p33, 0, %s32
      %s35 = ssub.s32 %s22, %s34
      %s36 = ssub.s32 %s23, %s30
      %s37 = sor.u32 %s35, %s36
      %p38 = scmp.eq.s32.totalorder %s37, 0
      %s40 = sadd.s32 %s39, 1
      %s41 = scalar_select %p38, %s39, %s40
      %p44 = pneg %p38
      %p45 = scmp.eq.s32.totalorder %s15, 1
      %p46 = por %p44, %p45
      %p47 = scmp.ne.s32.totalorder %s39, %s42
      %p48 = scmp.eq.s32.totalorder %s15, 0
      %p49 = por %p47, %p48
      %p50 = scmp.ne.s32.totalorder %s39, %s42
      %p51 = scmp.eq.s32.totalorder %s20, 1
      %p52 = por %p50, %p51
      %p53 = scmp.ne.s32.totalorder %s42, %s43
      %p54 = scmp.eq.s32.totalorder %s20, 0
      %p55 = por %p53, %p54
      %p56 = scmp.ne.s32.totalorder %s42, %s43
      %p57 = scmp.eq.s32.totalorder %s21, 1
      %p58 = por %p56, %p57
      %p60 = scmp.ne.s32.totalorder %s43, %s59
      %p61 = scmp.eq.s32.totalorder %s21, 0
      %p62 = por %p60, %p61
      %s64 = sadd.s32 %s63, 1
      %p67 = scmp.eq.s32.totalorder %s15, 1
      %p68 = scmp.ne.s32.totalorder %s63, %s65
      %p69 = scmp.eq.s32.totalorder %s15, 0
      %p70 = por %p68, %p69
      %p71 = scmp.ne.s32.totalorder %s63, %s65
      %p72 = scmp.eq.s32.totalorder %s20, 1
      %p73 = por %p71, %p72
      %p74 = scmp.ne.s32.totalorder %s65, %s66
      %p75 = scmp.eq.s32.totalorder %s20, 0
      %p76 = por %p74, %p75
      %p77 = scmp.ne.s32.totalorder %s65, %s66
      %p78 = scmp.eq.s32.totalorder %s21, 1
      %p79 = por %p77, %p78
      %p81 = scmp.ne.s32.totalorder %s66, %s80
      %p82 = scmp.eq.s32.totalorder %s21, 0
      %p83 = por %p81, %p82
      %s85 = sadd.s32 %s84, 1
      %p88 = scmp.eq.s32.totalorder %s15, 1
      %p89 = scmp.ne.s32.totalorder %s84, %s86
      %p90 = scmp.eq.s32.totalorder %s15, 0
      %p91 = por %p89, %p90
      %p92 = scmp.ne.s32.totalorder %s84, %s86
      %p93 = scmp.eq.s32.totalorder %s20, 1
      %p94 = por %p92, %p93
      %p95 = scmp.ne.s32.totalorder %s86, %s87
      %p96 = scmp.eq.s32.totalorder %s20, 0
      %p97 = por %p95, %p96
      %p98 = scmp.ne.s32.totalorder %s86, %s87
      %p99 = scmp.eq.s32.totalorder %s21, 1
      %p100 = por %p98, %p99
      %p102 = scmp.ne.s32.totalorder %s87, %s101
      %p103 = scmp.eq.s32.totalorder %s21, 0
      %p104 = por %p102, %p103
      %s106 = sadd.s32 %s105, 1
      %p109 = scmp.eq.s32.totalorder %s15, 1
      %p110 = scmp.ne.s32.totalorder %s105, %s107
      %p111 = scmp.eq.s32.totalorder %s15, 0
      %p112 = por %p110, %p111
      %p113 = scmp.ne.s32.totalorder %s105, %s107
      %p114 = scmp.eq.s32.totalorder %s20, 1
      %p115 = por %p113, %p114
      %p116 = scmp.ne.s32.totalorder %s107, %s108
      %p117 = scmp.eq.s32.totalorder %s20, 0
      %p118 = por %p116, %p117
      %p119 = scmp.ne.s32.totalorder %s107, %s108
      %p120 = scmp.eq.s32.totalorder %s21, 1
      %p121 = por %p119, %p120
      %p123 = scmp.ne.s32.totalorder %s108, %s122
      %p124 = scmp.eq.s32.totalorder %s21, 0
      %p125 = por %p123, %p124
      %s127 = sadd.s32 %s126, 1
      %p130 = scmp.eq.s32.totalorder %s15, 1
      %p131 = scmp.ne.s32.totalorder %s126, %s128
      %p132 = scmp.eq.s32.totalorder %s15, 0
      %p133 = por %p131, %p132
      %p134 = scmp.ne.s32.totalorder %s126, %s128
      %p135 = scmp.eq.s32.totalorder %s20, 1
      %p136 = por %p134, %p135
      %p137 = scmp.ne.s32.totalorder %s128, %s129
      %p138 = scmp.eq.s32.totalorder %s20, 0
      %p139 = por %p137, %p138
      %p140 = scmp.ne.s32.totalorder %s128, %s129
      %p141 = scmp.eq.s32.totalorder %s21, 1
      %p142 = por %p140, %p141
      %p144 = scmp.ne.s32.totalorder %s129, %s143
      %p145 = scmp.eq.s32.totalorder %s21, 0
      %p146 = por %p144, %p145
      %s147 = ssub.s32 %s22, %s34
      %s148 = ssub.s32 %s23, %s30
      %s149 = sor.u32 %s147, %s148
      %p150 = scmp.eq.s32.totalorder %s149, 0
      %s152 = sadd.s32 %s151, 1
      %s153 = scalar_select %p150, %s151, %s152
      %p156 = pneg %p150
      %p157 = scmp.eq.s32.totalorder %s15, 1
      %p158 = por %p156, %p157
      %p159 = scmp.ne.s32.totalorder %s151, %s154
      %p160 = scmp.eq.s32.totalorder %s15, 0
      %p161 = por %p159, %p160
      %p162 = scmp.ne.s32.totalorder %s151, %s154
      %p163 = scmp.eq.s32.totalorder %s20, 1
      %p164 = por %p162, %p163
      %p165 = scmp.ne.s32.totalorder %s154, %s155
      %p166 = scmp.eq.s32.totalorder %s20, 0
      %p167 = por %p165, %p166
      %p168 = scmp.ne.s32.totalorder %s154, %s155
      %p169 = scmp.eq.s32.totalorder %s21, 1
      %p170 = por %p168, %p169
      %p172 = scmp.ne.s32.totalorder %s155, %s171
      %p173 = scmp.eq.s32.totalorder %s21, 0
      %p174 = por %p172, %p173
      %p175 = scmp.le.s32.totalorder 1, %s15
      %p176 = scmp.lt.s32.totalorder %s15, 3
      %p177 = pnand %p175, %p176
      %p178 = pneg %p177
      // Predicated region
      $region9: #{tpu_custom_call.1} parent=5 // pred_check
        _
      $region10: #{tpu_custom_call.1} parent=5 // pred_check_branch
        %180 = sbr.rel (%p177) target = $region12
      $region11: #{tpu_custom_call.1} parent=5 // pred_region
        %s181 = ssub.s32 %s15, 1
        // Predicated region
        $region13: #{tpu_custom_call.1} parent=11 // pred_check
          %p182 = pneg %p76
        $region14: #{tpu_custom_call.1} parent=11 // pred_check_branch
          %184 = sbr.rel (%p182) target = $region16
        $region15: #{tpu_custom_call.1} parent=11 // pred_region
          _
        $region16: #{tpu_custom_call.1} parent=11 // pred_fallthru
          _
        // Predicated region
        $region17: #{tpu_custom_call.1} parent=11 // pred_check
          %p185 = pneg %p97
        $region18: #{tpu_custom_call.1} parent=11 // pred_check_branch
          %187 = sbr.rel (%p185) target = $region20
        $region19: #{tpu_custom_call.1} parent=11 // pred_region
          _
        $region20: #{tpu_custom_call.1} parent=11 // pred_fallthru
          _
        // Predicated region
        $region21: #{tpu_custom_call.1} parent=11 // pred_check
          %p188 = pneg %p118
        $region22: #{tpu_custom_call.1} parent=11 // pred_check_branch
          %190 = sbr.rel (%p188) target = $region24
        $region23: #{tpu_custom_call.1} parent=11 // pred_region
          _
        $region24: #{tpu_custom_call.1} parent=11 // pred_fallthru
          _
        // Predicated region
        $region25: #{tpu_custom_call.1} parent=11 // pred_check
          %p191 = pneg %p139
        $region26: #{tpu_custom_call.1} parent=11 // pred_check_branch
          %193 = sbr.rel (%p191) target = $region28
        $region27: #{tpu_custom_call.1} parent=11 // pred_region
          _
        $region28: #{tpu_custom_call.1} parent=11 // pred_fallthru
          _
      $region12: #{tpu_custom_call.1} parent=5 // pred_fallthru
        _
      %p194 = scmp.lt.s32.totalorder %s15, 2
      // Predicated region
      $region29: #{tpu_custom_call.1} parent=5 // pred_check
        %p195 = pneg %p194
      $region30: #{tpu_custom_call.1} parent=5 // pred_check_branch
        %197 = sbr.rel (%p195) target = $region32
      $region31: #{tpu_custom_call.1} parent=5 // pred_region
        // Predicated region
        $region33: #{tpu_custom_call.1} parent=31 // pred_check
          %p198 = pneg %p49
        $region34: #{tpu_custom_call.1} parent=31 // pred_check_branch
          %200 = sbr.rel (%p198) target = $region36
        $region35: #{tpu_custom_call.1} parent=31 // pred_region
          %s201 = smul.u32 2, %s23
          %p202 = scmp.lt.s32.totalorder %s22, 1
          %s203 = scalar_select %p202, %s22, 1
          %p204 = scmp.lt.s32.totalorder %s201, 1
          %s205 = scalar_select %p204, %s201, 1
          %s206 = smul.addr %s203, 2
          %s207 = sadd.s32 %s205, %s206
          %s208 = smul.addr %s207, 4
          %s209 = scalar_lea.vmem %s0, %s208
          %s210 = smul.u32 2, %s23
        $region36: #{tpu_custom_call.1} parent=31 // pred_fallthru
          _
      $region32: #{tpu_custom_call.1} parent=5 // pred_fallthru
        _
      %p211 = scmp.le.s32.totalorder 1, %s15
      %p212 = scmp.lt.s32.totalorder %s15, 3
      %p213 = pnand %p211, %p212
      %p214 = pneg %p213
      // Predicated region
      $region37: #{tpu_custom_call.1} parent=5 // pred_check
        _
      $region38: #{tpu_custom_call.1} parent=5 // pred_check_branch
        %216 = sbr.rel (%p213) target = $region40
      $region39: #{tpu_custom_call.1} parent=5 // pred_region
        %s217 = ssub.s32 %s15, 1
        %s218 = smul.u32 2, %s25
        %p219 = scmp.lt.s32.totalorder %s24, 1
        %s220 = scalar_select %p219, %s24, 1
        %p221 = scmp.lt.s32.totalorder %s218, 1
        %s222 = scalar_select %p221, %s218, 1
        %s223 = smul.addr %s220, 2
        %s224 = sadd.s32 %s222, %s223
        %s225 = smul.addr %s224, 4
        %s226 = scalar_lea.vmem %s0, %s225
        %p227 = pneg %p55
        %p228 = pneg %p52
        %p229 = pneg %p76
        %p230 = pneg %p73
        %p231 = pneg %p97
        %p232 = pneg %p94
        %p233 = pneg %p118
        %p234 = pneg %p115
        %p235 = pneg %p139
        %p236 = pneg %p136
        %p237 = pneg %p167
        %p238 = pneg %p164
        %s239 = sand.u32 %s154, 1
        %s240 = scalar_lea.sflag [#allocation4], %s239
        %s241 = sand.u32 %s154, 1
        %s242 = smul.addr %s241, 2
        %s243 = scalar_lea.vmem [#allocation3], %s242
        %s244 = smul.u32 2, %s25
        %p245 = scmp.lt.s32.totalorder %s24, 1
        %s246 = scalar_select %p245, %s24, 1
        %p247 = scmp.lt.s32.totalorder %s244, 1
        %s248 = scalar_select %p247, %s244, 1
        %s249 = smul.addr %s246, 2
        %s250 = sadd.s32 %s248, %s249
        %s251 = smul.addr %s250, 4
        %s252 = scalar_lea.vmem %s0, %s251
        %s253 = smul.u32 2, %s25
        %s254 = smul.u32 2, %s25
        %v256 = vld [vmem:[%s252] sm:$0xff]
        %v258 = vcombine.high %v256, %v256
        %v260 = vpack.c.bf16 %v256, %v256
        %v261 = vpack.c.bf16 %v258, %v258
        %v262 = vld [vmem:[%s1] sm:$0xf]
        %v263 = vld [vmem:[%s1 + $0x4] sm:$0xf]
        %v264 = vld [vmem:[%s1 + $0x8] sm:$0xf]
        %v265 = vld [vmem:[%s1 + $0xc] sm:$0xf]
        %v266 = vld [vmem:[%s1 + $0x10] sm:$0xf]
        %v267 = vld [vmem:[%s1 + $0x14] sm:$0xf]
        %v268 = vld [vmem:[%s1 + $0x18] sm:$0xf]
        %v269 = vld [vmem:[%s1 + $0x1c] sm:$0xf]
        %v270 = vld [vmem:[%s1 + $0x20] sm:$0xf]
        %v271 = vld [vmem:[%s1 + $0x24] sm:$0xf]
        %v272 = vld [vmem:[%s1 + $0x28] sm:$0xf]
        %v273 = vld [vmem:[%s1 + $0x2c] sm:$0xf]
        %v274 = vld [vmem:[%s1 + $0x30] sm:$0xf]
        %v275 = vld [vmem:[%s1 + $0x34] sm:$0xf]
        %v276 = vld [vmem:[%s1 + $0x38] sm:$0xf]
        %v277 = vld [vmem:[%s1 + $0x3c] sm:$0xf]
        %v278 = vld [vmem:[%s2] sm:$0xff]
        %v279 = vld [vmem:[%s2 + $0x8] sm:$0xff]
        %v280 = vld [vmem:[%s2 + $0x10] sm:$0xff]
        %v281 = vld [vmem:[%s2 + $0x18] sm:$0xff]
        %v282 = vld [vmem:[%s2 + $0x20] sm:$0xff]
        %v283 = vld [vmem:[%s2 + $0x28] sm:$0xff]
        %v284 = vld [vmem:[%s2 + $0x30] sm:$0xff]
        %v285 = vld [vmem:[%s2 + $0x38] sm:$0xff]
        %v286 = vld [vmem:[%s2 + $0x40] sm:$0xff]
        %v287 = vld [vmem:[%s2 + $0x48] sm:$0xff]
        %v288 = vld [vmem:[%s2 + $0x50] sm:$0xff]
        %v289 = vld [vmem:[%s2 + $0x58] sm:$0xff]
        %v290 = vld [vmem:[%s2 + $0x60] sm:$0xff]
        %v291 = vld [vmem:[%s2 + $0x68] sm:$0xff]
        %v292 = vld [vmem:[%s2 + $0x70] sm:$0xff]
        %v293 = vld [vmem:[%s2 + $0x78] sm:$0xff]
        %295 = vset.pattern.permute.xlu0 0
        %296 = vperm.xlu0 %295, %v278
        %v297 = vpop.permute.xlu0 %296
        %300 = vset.pattern.permute.xlu0 0
        %301 = vperm.xlu0 %300, %v279
        %v302 = vpop.permute.xlu0 %301
        %305 = vset.pattern.permute.xlu0 0
        %306 = vperm.xlu0 %305, %v280
        %v307 = vpop.permute.xlu0 %306
        %310 = vset.pattern.permute.xlu0 0
        %311 = vperm.xlu0 %310, %v281
        %v312 = vpop.permute.xlu0 %311
        %315 = vset.pattern.permute.xlu0 0
        %316 = vperm.xlu0 %315, %v282
        %v317 = vpop.permute.xlu0 %316
        %320 = vset.pattern.permute.xlu0 0
        %321 = vperm.xlu0 %320, %v283
        %v322 = vpop.permute.xlu0 %321
        %325 = vset.pattern.permute.xlu0 0
        %326 = vperm.xlu0 %325, %v284
        %v327 = vpop.permute.xlu0 %326
        %330 = vset.pattern.permute.xlu0 0
        %331 = vperm.xlu0 %330, %v285
        %v332 = vpop.permute.xlu0 %331
        %335 = vset.pattern.permute.xlu0 0
        %336 = vperm.xlu0 %335, %v286
        %v337 = vpop.permute.xlu0 %336
        %340 = vset.pattern.permute.xlu0 0
        %341 = vperm.xlu0 %340, %v287
        %v342 = vpop.permute.xlu0 %341
        %345 = vset.pattern.permute.xlu0 0
        %346 = vperm.xlu0 %345, %v288
        %v347 = vpop.permute.xlu0 %346
        %350 = vset.pattern.permute.xlu0 0
        %351 = vperm.xlu0 %350, %v289
        %v352 = vpop.permute.xlu0 %351
        %355 = vset.pattern.permute.xlu0 0
        %356 = vperm.xlu0 %355, %v290
        %v357 = vpop.permute.xlu0 %356
        %360 = vset.pattern.permute.xlu0 0
        %361 = vperm.xlu0 %360, %v291
        %v362 = vpop.permute.xlu0 %361
        %365 = vset.pattern.permute.xlu0 0
        %366 = vperm.xlu0 %365, %v292
        %v367 = vpop.permute.xlu0 %366
        %370 = vset.pattern.permute.xlu0 0
        %371 = vperm.xlu0 %370, %v293
        %v372 = vpop.permute.xlu0 %371
        %v390 = vunpack.c.l.b16 %v262
        %v391 = vunpack.c.l.b16 %v263
        %v392 = vunpack.c.l.b16 %v264
        %v393 = vunpack.c.l.b16 %v265
        %v394 = vunpack.c.l.b16 %v266
        %v395 = vunpack.c.l.b16 %v267
        %v396 = vunpack.c.l.b16 %v268
        %v397 = vunpack.c.l.b16 %v269
        %v398 = vunpack.c.l.b16 %v270
        %v399 = vunpack.c.l.b16 %v271
        %v400 = vunpack.c.l.b16 %v272
        %v401 = vunpack.c.l.b16 %v273
        %v402 = vunpack.c.l.b16 %v274
        %v403 = vunpack.c.l.b16 %v275
        %v404 = vunpack.c.l.b16 %v276
        %v405 = vunpack.c.l.b16 %v277
        %v406 = vpack.c.b16 %v391, %v390
        %v407 = vpack.c.b16 %v393, %v392
        %v408 = vpack.c.b16 %v395, %v394
        %v409 = vpack.c.b16 %v397, %v396
        %v410 = vpack.c.b16 %v399, %v398
        %v411 = vpack.c.b16 %v401, %v400
        %v412 = vpack.c.b16 %v403, %v402
        %v413 = vpack.c.b16 %v405, %v404
        %vm414 = vcmask 31744
        %v416 = vsel %vm414, %v406, 0
        %v419 = vsel %vm414, %v407, 0
        %v422 = vsel %vm414, %v408, 0
        %v425 = vsel %vm414, %v409, 0
        %v428 = vsel %vm414, %v410, 0
        %v431 = vsel %vm414, %v411, 0
        %v434 = vsel %vm414, %v412, 0
        %v437 = vsel %vm414, %v413, 0
        %vm439 = vcmask 1041408
        %v441 = vsel %vm439, %v260, 0
        %v444 = vsel %vm439, %v261, 0
        %446 = vmatprep.subr.bf16.mxu0 %v444
        %447 = vmatpush1.bf16.msra.mxu0 %v441
        %448 = vmatprep.subr.bf16.mxu0 0
        %449 = vmatpush1.bf16.msra.mxu0 0
        %450 = vmatprep.subr.bf16.mxu0 0
        %451 = vmatpush1.bf16.msra.mxu0 0
        %452 = vmatprep.subr.bf16.mxu0 0
        %453 = vmatpush1.bf16.msra.mxu0 0
        %454 = vmatprep.subr.bf16.mxu0 0
        %455 = vmatpush1.bf16.msra.mxu0 0
        %456 = vmatprep.subr.bf16.mxu0 0
        %457 = vmatpush1.bf16.msra.mxu0 0
        %458 = vmatprep.subr.bf16.mxu0 0
        %459 = vmatpush1.bf16.msra.mxu0 0
        %460 = vmatprep.subr.bf16.mxu0 0
        %461 = vmatpush1.bf16.msra.mxu0 0
        %462 = vmatprep.subr.bf16.mxu0 0
        %463 = vmatpush1.bf16.msra.mxu0 0
        %464 = vmatprep.subr.bf16.mxu0 0
        %465 = vmatpush1.bf16.msra.mxu0 0
        %466 = vmatprep.subr.bf16.mxu0 0
        %467 = vmatpush1.bf16.msra.mxu0 0
        %468 = vmatprep.subr.bf16.mxu0 0
        %469 = vmatpush1.bf16.msra.mxu0 0
        %470 = vmatprep.subr.bf16.mxu0 0
        %471 = vmatpush1.bf16.msra.mxu0 0
        %472 = vmatprep.subr.bf16.mxu0 0
        %473 = vmatpush1.bf16.msra.mxu0 0
        %474 = vmatprep.subr.bf16.mxu0 0
        %475 = vmatpush1.bf16.msra.mxu0 0
        %476 = vmatprep.subr.bf16.mxu0 0
        %477 = vmatpush1.bf16.msra.mxu0 0
        %478 = vmatprep.mubr.bf16.mxu0 0
        %479 = vmatmul.mubr.bf16.gmra.mrb[0].mxu0 %v416
        %v480 = vpop.f32.mrb[0].mxu0
        %v481 = vadd.f32 %v297, %v480
        %v482 = vpop.f32.mrb[0].mxu0
        %v483 = vadd.f32 %v297, %v482
        %v484 = vpop.f32.mrb[0].mxu0
        %v485 = vadd.f32 %v302, %v484
        %v486 = vpop.f32.mrb[0].mxu0
        %v487 = vadd.f32 %v302, %v486
        %488 = vmatprep.mubr.bf16.mxu0 0
        %489 = vmatmul.mubr.bf16.gmra.mrb[0].mxu0 %v419
        %v490 = vpop.f32.mrb[0].mxu0
        %v491 = vadd.f32 %v307, %v490
        %v492 = vpop.f32.mrb[0].mxu0
        %v493 = vadd.f32 %v307, %v492
        %v494 = vpop.f32.mrb[0].mxu0
        %v495 = vadd.f32 %v312, %v494
        %v496 = vpop.f32.mrb[0].mxu0
        %v497 = vadd.f32 %v312, %v496
        %498 = vmatprep.mubr.bf16.mxu0 0
        %499 = vmatmul.mubr.bf16.gmra.mrb[0].mxu0 %v422
        %v500 = vpop.f32.mrb[0].mxu0
        %v501 = vadd.f32 %v317, %v500
        %v502 = vpop.f32.mrb[0].mxu0
        %v503 = vadd.f32 %v317, %v502
        %v504 = vpop.f32.mrb[0].mxu0
        %v505 = vadd.f32 %v322, %v504
        %v506 = vpop.f32.mrb[0].mxu0
        %v507 = vadd.f32 %v322, %v506
        %508 = vmatprep.mubr.bf16.mxu0 0
        %509 = vmatmul.mubr.bf16.gmra.mrb[0].mxu0 %v425
        %v510 = vpop.f32.mrb[0].mxu0
        %v511 = vadd.f32 %v327, %v510
        %v512 = vpop.f32.mrb[0].mxu0
        %v513 = vadd.f32 %v327, %v512
        %v514 = vpop.f32.mrb[0].mxu0
        %v515 = vadd.f32 %v332, %v514
        %v516 = vpop.f32.mrb[0].mxu0
        %v517 = vadd.f32 %v332, %v516
        %518 = vmatprep.mubr.bf16.mxu0 0
        %519 = vmatmul.mubr.bf16.gmra.mrb[0].mxu0 %v428
        %v520 = vpop.f32.mrb[0].mxu0
        %v521 = vadd.f32 %v337, %v520
        %v522 = vpop.f32.mrb[0].mxu0
        %v523 = vadd.f32 %v337, %v522
        %v524 = vpop.f32.mrb[0].mxu0
        %v525 = vadd.f32 %v342, %v524
        %v526 = vpop.f32.mrb[0].mxu0
        %v527 = vadd.f32 %v342, %v526
        %528 = vmatprep.mubr.bf16.mxu0 0
        %529 = vmatmul.mubr.bf16.gmra.mrb[0].mxu0 %v431
        %v530 = vpop.f32.mrb[0].mxu0
        %v531 = vadd.f32 %v347, %v530
        %v532 = vpop.f32.mrb[0].mxu0
        %v533 = vadd.f32 %v347, %v532
        %v534 = vpop.f32.mrb[0].mxu0
        %v535 = vadd.f32 %v352, %v534
        %v536 = vpop.f32.mrb[0].mxu0
        %v537 = vadd.f32 %v352, %v536
        %538 = vmatprep.mubr.bf16.mxu0 0
        %539 = vmatmul.mubr.bf16.gmra.mrb[0].mxu0 %v434
        %v540 = vpop.f32.mrb[0].mxu0
        %v541 = vadd.f32 %v357, %v540
        %v542 = vpop.f32.mrb[0].mxu0
        %v543 = vadd.f32 %v357, %v542
        %v544 = vpop.f32.mrb[0].mxu0
        %v545 = vadd.f32 %v362, %v544
        %v546 = vpop.f32.mrb[0].mxu0
        %v547 = vadd.f32 %v362, %v546
        %548 = vmatprep.mubr.bf16.mxu0 0
        %549 = vmatmul.mubr.bf16.gmra.mrb[0].mxu0 %v437
        %v550 = vpop.f32.mrb[0].mxu0
        %v551 = vadd.f32 %v367, %v550
        %v552 = vpop.f32.mrb[0].mxu0
        %v553 = vadd.f32 %v367, %v552
        %v554 = vpop.f32.mrb[0].mxu0
        %v555 = vadd.f32 %v372, %v554
        %v556 = vpop.f32.mrb[0].mxu0
        %v557 = vadd.f32 %v372, %v556
        %558 = vdwg.mxu0
        %v559 = vmax.f32 %v481, 0.0
        %v560 = vmax.f32 %v483, 0.0
        %v561 = vmax.f32 %v485, 0.0
        %v562 = vmax.f32 %v487, 0.0
        %v563 = vmax.f32 %v491, 0.0
        %v564 = vmax.f32 %v493, 0.0
        %v565 = vmax.f32 %v495, 0.0
        %v566 = vmax.f32 %v497, 0.0
        %v567 = vmax.f32 %v501, 0.0
        %v568 = vmax.f32 %v503, 0.0
        %v569 = vmax.f32 %v505, 0.0
        %v570 = vmax.f32 %v507, 0.0
        %v571 = vmax.f32 %v511, 0.0
        %v572 = vmax.f32 %v513, 0.0
        %v573 = vmax.f32 %v515, 0.0
        %v574 = vmax.f32 %v517, 0.0
        %v575 = vmax.f32 %v521, 0.0
        %v576 = vmax.f32 %v523, 0.0
        %v577 = vmax.f32 %v525, 0.0
        %v578 = vmax.f32 %v527, 0.0
        %v579 = vmax.f32 %v531, 0.0
        %v580 = vmax.f32 %v533, 0.0
        %v581 = vmax.f32 %v535, 0.0
        %v582 = vmax.f32 %v537, 0.0
        %v583 = vmax.f32 %v541, 0.0
        %v584 = vmax.f32 %v543, 0.0
        %v585 = vmax.f32 %v545, 0.0
        %v586 = vmax.f32 %v547, 0.0
        %v587 = vmax.f32 %v551, 0.0
        %v588 = vmax.f32 %v553, 0.0
        %v589 = vmax.f32 %v555, 0.0
        %v590 = vmax.f32 %v557, 0.0
        %v591 = vpack.c.bf16 %v561, %v559
        %v592 = vpack.c.bf16 %v562, %v560
        %v593 = vpack.c.bf16 %v565, %v563
        %v594 = vpack.c.bf16 %v566, %v564
        %v595 = vpack.c.bf16 %v569, %v567
        %v596 = vpack.c.bf16 %v570, %v568
        %v597 = vpack.c.bf16 %v573, %v571
        %v598 = vpack.c.bf16 %v574, %v572
        %v599 = vpack.c.bf16 %v577, %v575
        %v600 = vpack.c.bf16 %v578, %v576
        %v601 = vpack.c.bf16 %v581, %v579
        %v602 = vpack.c.bf16 %v582, %v580
        %v603 = vpack.c.bf16 %v585, %v583
        %v604 = vpack.c.bf16 %v586, %v584
        %v605 = vpack.c.bf16 %v589, %v587
        %v606 = vpack.c.bf16 %v590, %v588
        %v607 = vld [vmem:[%s3] sm:$0x1]
        %v608 = vld [vmem:[%s1 + $0x40] sm:$0xf]
        %v609 = vld [vmem:[%s1 + $0x44] sm:$0xf]
        %v610 = vld [vmem:[%s1 + $0x48] sm:$0xf]
        %v611 = vld [vmem:[%s1 + $0x4c] sm:$0xf]
        %v612 = vld [vmem:[%s1 + $0x50] sm:$0xf]
        %v613 = vld [vmem:[%s1 + $0x54] sm:$0xf]
        %v614 = vld [vmem:[%s1 + $0x58] sm:$0xf]
        %v615 = vld [vmem:[%s1 + $0x5c] sm:$0xf]
        %v616 = vld [vmem:[%s1 + $0x60] sm:$0xf]
        %v617 = vld [vmem:[%s1 + $0x64] sm:$0xf]
        %v618 = vld [vmem:[%s1 + $0x68] sm:$0xf]
        %v619 = vld [vmem:[%s1 + $0x6c] sm:$0xf]
        %v620 = vld [vmem:[%s1 + $0x70] sm:$0xf]
        %v621 = vld [vmem:[%s1 + $0x74] sm:$0xf]
        %v622 = vld [vmem:[%s1 + $0x78] sm:$0xf]
        %v623 = vld [vmem:[%s1 + $0x7c] sm:$0xf]
        %v624 = vld [vmem:[%s2 + $0x80] sm:$0xff]
        %v625 = vld [vmem:[%s2 + $0x88] sm:$0xff]
        %v626 = vld [vmem:[%s2 + $0x90] sm:$0xff]
        %v627 = vld [vmem:[%s2 + $0x98] sm:$0xff]
        %v628 = vld [vmem:[%s2 + $0xa0] sm:$0xff]
        %v629 = vld [vmem:[%s2 + $0xa8] sm:$0xff]
        %v630 = vld [vmem:[%s2 + $0xb0] sm:$0xff]
        %v631 = vld [vmem:[%s2 + $0xb8] sm:$0xff]
        %v632 = vld [vmem:[%s2 + $0xc0] sm:$0xff]
        %v633 = vld [vmem:[%s2 + $0xc8] sm:$0xff]
        %v634 = vld [vmem:[%s2 + $0xd0] sm:$0xff]
        %v635 = vld [vmem:[%s2 + $0xd8] sm:$0xff]
        %v636 = vld [vmem:[%s2 + $0xe0] sm:$0xff]
        %v637 = vld [vmem:[%s2 + $0xe8] sm:$0xff]
        %v638 = vld [vmem:[%s2 + $0xf0] sm:$0xff]
        %v639 = vld [vmem:[%s2 + $0xf8] sm:$0xff]
        %641 = vset.pattern.permute.xlu0 0
        %642 = vperm.xlu0 %641, %v624
        %v643 = vpop.permute.xlu0 %642
        %646 = vset.pattern.permute.xlu0 0
        %647 = vperm.xlu0 %646, %v625
        %v648 = vpop.permute.xlu0 %647
        %651 = vset.pattern.permute.xlu0 0
        %652 = vperm.xlu0 %651, %v626
        %v653 = vpop.permute.xlu0 %652
        %656 = vset.pattern.permute.xlu0 0
        %657 = vperm.xlu0 %656, %v627
        %v658 = vpop.permute.xlu0 %657
        %661 = vset.pattern.permute.xlu0 0
        %662 = vperm.xlu0 %661, %v628
        %v663 = vpop.permute.xlu0 %662
        %666 = vset.pattern.permute.xlu0 0
        %667 = vperm.xlu0 %666, %v629
        %v668 = vpop.permute.xlu0 %667
        %671 = vset.pattern.permute.xlu0 0
        %672 = vperm.xlu0 %671, %v630
        %v673 = vpop.permute.xlu0 %672
        %676 = vset.pattern.permute.xlu0 0
        %677 = vperm.xlu0 %676, %v631
        %v678 = vpop.permute.xlu0 %677
        %681 = vset.pattern.permute.xlu0 0
        %682 = vperm.xlu0 %681, %v632
        %v683 = vpop.permute.xlu0 %682
        %686 = vset.pattern.permute.xlu0 0
        %687 = vperm.xlu0 %686, %v633
        %v688 = vpop.permute.xlu0 %687
        %691 = vset.pattern.permute.xlu0 0
        %692 = vperm.xlu0 %691, %v634
        %v693 = vpop.permute.xlu0 %692
        %696 = vset.pattern.permute.xlu0 0
        %697 = vperm.xlu0 %696, %v635
        %v698 = vpop.permute.xlu0 %697
        %701 = vset.pattern.permute.xlu0 0
        %702 = vperm.xlu0 %701, %v636
        %v703 = vpop.permute.xlu0 %702
        %706 = vset.pattern.permute.xlu0 0
        %707 = vperm.xlu0 %706, %v637
        %v708 = vpop.permute.xlu0 %707
        %711 = vset.pattern.permute.xlu0 0
        %712 = vperm.xlu0 %711, %v638
        %v713 = vpop.permute.xlu0 %712
        %716 = vset.pattern.permute.xlu0 0
        %717 = vperm.xlu0 %716, %v639
        %v718 = vpop.permute.xlu0 %717
        %v736 = vunpack.c.l.b16 %v608
        %v737 = vunpack.c.l.b16 %v609
        %v738 = vunpack.c.l.b16 %v610
        %v739 = vunpack.c.l.b16 %v611
        %v740 = vunpack.c.l.b16 %v612
        %v741 = vunpack.c.l.b16 %v613
        %v742 = vunpack.c.l.b16 %v614
        %v743 = vunpack.c.l.b16 %v615
        %v744 = vunpack.c.l.b16 %v616
        %v745 = vunpack.c.l.b16 %v617
        %v746 = vunpack.c.l.b16 %v618
        %v747 = vunpack.c.l.b16 %v619
        %v748 = vunpack.c.l.b16 %v620
        %v749 = vunpack.c.l.b16 %v621
        %v750 = vunpack.c.l.b16 %v622
        %v751 = vunpack.c.l.b16 %v623
        %v752 = vpack.c.b16 %v737, %v736
        %v753 = vpack.c.b16 %v739, %v738
        %v754 = vpack.c.b16 %v741, %v740
        %v755 = vpack.c.b16 %v743, %v742
        %v756 = vpack.c.b16 %v745, %v744
        %v757 = vpack.c.b16 %v747, %v746
        %v758 = vpack.c.b16 %v749, %v748
        %v759 = vpack.c.b16 %v751, %v750
        %v761 = vsel %vm414, %v752, 0
        %v764 = vsel %vm414, %v753, 0
        %v767 = vsel %vm414, %v754, 0
        %v770 = vsel %vm414, %v755, 0
        %v773 = vsel %vm414, %v756, 0
        %v776 = vsel %vm414, %v757, 0
        %v779 = vsel %vm414, %v758, 0
        %v782 = vsel %vm414, %v759, 0
        %784 = vmatprep.subr.bf16.mxu0 %v444
        %785 = vmatpush1.bf16.msra.mxu0 %v441
        %786 = vmatprep.subr.bf16.mxu0 0
        %787 = vmatpush1.bf16.msra.mxu0 0
        %788 = vmatprep.subr.bf16.mxu0 0
        %789 = vmatpush1.bf16.msra.mxu0 0
        %790 = vmatprep.subr.bf16.mxu0 0
        %791 = vmatpush1.bf16.msra.mxu0 0
        %792 = vmatprep.subr.bf16.mxu0 0
        %793 = vmatpush1.bf16.msra.mxu0 0
        %794 = vmatprep.subr.bf16.mxu0 0
        %795 = vmatpush1.bf16.msra.mxu0 0
        %796 = vmatprep.subr.bf16.mxu0 0
        %797 = vmatpush1.bf16.msra.mxu0 0
        %798 = vmatprep.subr.bf16.mxu0 0
        %799 = vmatpush1.bf16.msra.mxu0 0
        %800 = vmatprep.subr.bf16.mxu0 0
        %801 = vmatpush1.bf16.msra.mxu0 0
        %802 = vmatprep.subr.bf16.mxu0 0
        %803 = vmatpush1.bf16.msra.mxu0 0
        %804 = vmatprep.subr.bf16.mxu0 0
        %805 = vmatpush1.bf16.msra.mxu0 0
        %806 = vmatprep.subr.bf16.mxu0 0
        %807 = vmatpush1.bf16.msra.mxu0 0
        %808 = vmatprep.subr.bf16.mxu0 0
        %809 = vmatpush1.bf16.msra.mxu0 0
        %810 = vmatprep.subr.bf16.mxu0 0
        %811 = vmatpush1.bf16.msra.mxu0 0
        %812 = vmatprep.subr.bf16.mxu0 0
        %813 = vmatpush1.bf16.msra.mxu0 0
        %814 = vmatprep.subr.bf16.mxu0 0
        %815 = vmatpush1.bf16.msra.mxu0 0
        %816 = vmatprep.mubr.bf16.mxu0 0
        %817 = vmatmul.mubr.bf16.gmra.mrb[0].mxu0 %v761
        %v818 = vpop.f32.mrb[0].mxu0
        %v819 = vadd.f32 %v643, %v818
        %v820 = vpop.f32.mrb[0].mxu0
        %v821 = vadd.f32 %v643, %v820
        %v822 = vpop.f32.mrb[0].mxu0
        %v823 = vadd.f32 %v648, %v822
        %v824 = vpop.f32.mrb[0].mxu0
        %v825 = vadd.f32 %v648, %v824
        %826 = vmatprep.mubr.bf16.mxu0 0
        %827 = vmatmul.mubr.bf16.gmra.mrb[0].mxu0 %v764
        %v828 = vpop.f32.mrb[0].mxu0
        %v829 = vadd.f32 %v653, %v828
        %v830 = vpop.f32.mrb[0].mxu0
        %v831 = vadd.f32 %v653, %v830
        %v832 = vpop.f32.mrb[0].mxu0
        %v833 = vadd.f32 %v658, %v832
        %v834 = vpop.f32.mrb[0].mxu0
        %v835 = vadd.f32 %v658, %v834
        %836 = vmatprep.mubr.bf16.mxu0 0
        %837 = vmatmul.mubr.bf16.gmra.mrb[0].mxu0 %v767
        %v838 = vpop.f32.mrb[0].mxu0
        %v839 = vadd.f32 %v663, %v838
        %v840 = vpop.f32.mrb[0].mxu0
        %v841 = vadd.f32 %v663, %v840
        %v842 = vpop.f32.mrb[0].mxu0
        %v843 = vadd.f32 %v668, %v842
        %v844 = vpop.f32.mrb[0].mxu0
        %v845 = vadd.f32 %v668, %v844
        %846 = vmatprep.mubr.bf16.mxu0 0
        %847 = vmatmul.mubr.bf16.gmra.mrb[0].mxu0 %v770
        %v848 = vpop.f32.mrb[0].mxu0
        %v849 = vadd.f32 %v673, %v848
        %v850 = vpop.f32.mrb[0].mxu0
        %v851 = vadd.f32 %v673, %v850
        %v852 = vpop.f32.mrb[0].mxu0
        %v853 = vadd.f32 %v678, %v852
        %v854 = vpop.f32.mrb[0].mxu0
        %v855 = vadd.f32 %v678, %v854
        %856 = vmatprep.mubr.bf16.mxu0 0
        %857 = vmatmul.mubr.bf16.gmra.mrb[0].mxu0 %v773
        %v858 = vpop.f32.mrb[0].mxu0
        %v859 = vadd.f32 %v683, %v858
        %v860 = vpop.f32.mrb[0].mxu0
        %v861 = vadd.f32 %v683, %v860
        %v862 = vpop.f32.mrb[0].mxu0
        %v863 = vadd.f32 %v688, %v862
        %v864 = vpop.f32.mrb[0].mxu0
        %v865 = vadd.f32 %v688, %v864
        %866 = vmatprep.mubr.bf16.mxu0 0
        %867 = vmatmul.mubr.bf16.gmra.mrb[0].mxu0 %v776
        %v868 = vpop.f32.mrb[0].mxu0
        %v869 = vadd.f32 %v693, %v868
        %v870 = vpop.f32.mrb[0].mxu0
        %v871 = vadd.f32 %v693, %v870
        %v872 = vpop.f32.mrb[0].mxu0
        %v873 = vadd.f32 %v698, %v872
        %v874 = vpop.f32.mrb[0].mxu0
        %v875 = vadd.f32 %v698, %v874
        %876 = vmatprep.mubr.bf16.mxu0 0
        %877 = vmatmul.mubr.bf16.gmra.mrb[0].mxu0 %v779
        %v878 = vpop.f32.mrb[0].mxu0
        %v879 = vadd.f32 %v703, %v878
        %v880 = vpop.f32.mrb[0].mxu0
        %v881 = vadd.f32 %v703, %v880
        %v882 = vpop.f32.mrb[0].mxu0
        %v883 = vadd.f32 %v708, %v882
        %v884 = vpop.f32.mrb[0].mxu0
        %v885 = vadd.f32 %v708, %v884
        %886 = vmatprep.mubr.bf16.mxu0 0
        %887 = vmatmul.mubr.bf16.gmra.mrb[0].mxu0 %v782
        %v888 = vpop.f32.mrb[0].mxu0
        %v889 = vadd.f32 %v713, %v888
        %v890 = vpop.f32.mrb[0].mxu0
        %v891 = vadd.f32 %v713, %v890
        %v892 = vpop.f32.mrb[0].mxu0
        %v893 = vadd.f32 %v718, %v892
        %v894 = vpop.f32.mrb[0].mxu0
        %v895 = vadd.f32 %v718, %v894
        %896 = vdwg.mxu0
        %v897 = vmax.f32 %v819, 0.0
        %v898 = vmax.f32 %v821, 0.0
        %v899 = vmax.f32 %v823, 0.0
        %v900 = vmax.f32 %v825, 0.0
        %v901 = vmax.f32 %v829, 0.0
        %v902 = vmax.f32 %v831, 0.0
        %v903 = vmax.f32 %v833, 0.0
        %v904 = vmax.f32 %v835, 0.0
        %v905 = vmax.f32 %v839, 0.0
        %v906 = vmax.f32 %v841, 0.0
        %v907 = vmax.f32 %v843, 0.0
        %v908 = vmax.f32 %v845, 0.0
        %v909 = vmax.f32 %v849, 0.0
        %v910 = vmax.f32 %v851, 0.0
        %v911 = vmax.f32 %v853, 0.0
        %v912 = vmax.f32 %v855, 0.0
        %v913 = vmax.f32 %v859, 0.0
        %v914 = vmax.f32 %v861, 0.0
        %v915 = vmax.f32 %v863, 0.0
        %v916 = vmax.f32 %v865, 0.0
        %v917 = vmax.f32 %v869, 0.0
        %v918 = vmax.f32 %v871, 0.0
        %v919 = vmax.f32 %v873, 0.0
        %v920 = vmax.f32 %v875, 0.0
        %v921 = vmax.f32 %v879, 0.0
        %v922 = vmax.f32 %v881, 0.0
        %v923 = vmax.f32 %v883, 0.0
        %v924 = vmax.f32 %v885, 0.0
        %v925 = vmax.f32 %v889, 0.0
        %v926 = vmax.f32 %v891, 0.0
        %v927 = vmax.f32 %v893, 0.0
        %v928 = vmax.f32 %v895, 0.0
        %v929 = vpack.c.bf16 %v899, %v897
        %v930 = vpack.c.bf16 %v900, %v898
        %v931 = vpack.c.bf16 %v903, %v901
        %v932 = vpack.c.bf16 %v904, %v902
        %v933 = vpack.c.bf16 %v907, %v905
        %v934 = vpack.c.bf16 %v908, %v906
        %v935 = vpack.c.bf16 %v911, %v909
        %v936 = vpack.c.bf16 %v912, %v910
        %v937 = vpack.c.bf16 %v915, %v913
        %v938 = vpack.c.bf16 %v916, %v914
        %v939 = vpack.c.bf16 %v919, %v917
        %v940 = vpack.c.bf16 %v920, %v918
        %v941 = vpack.c.bf16 %v923, %v921
        %v942 = vpack.c.bf16 %v924, %v922
        %v943 = vpack.c.bf16 %v927, %v925
        %v944 = vpack.c.bf16 %v928, %v926
        %v945 = vld [vmem:[%s3 + $0x1] sm:$0x1]
        %946 = vmatprep.subr.bf16.mxu0 %v930
        %947 = vmatpush1.bf16.msra.mxu0 %v929
        %948 = vmatprep.subr.bf16.mxu0 %v932
        %949 = vmatpush1.bf16.msra.mxu0 %v931
        %950 = vmatprep.subr.bf16.mxu0 %v934
        %951 = vmatpush1.bf16.msra.mxu0 %v933
        %952 = vmatprep.subr.bf16.mxu0 %v936
        %953 = vmatpush1.bf16.msra.mxu0 %v935
        %954 = vmatprep.subr.bf16.mxu0 %v938
        %955 = vmatpush1.bf16.msra.mxu0 %v937
        %956 = vmatprep.subr.bf16.mxu0 %v940
        %957 = vmatpush1.bf16.msra.mxu0 %v939
        %958 = vmatprep.subr.bf16.mxu0 %v942
        %959 = vmatpush1.bf16.msra.mxu0 %v941
        %960 = vmatprep.subr.bf16.mxu0 %v944
        %961 = vmatpush1.bf16.msra.mxu0 %v943
        %962 = vmatprep.subr.bf16.mxu0 0
        %963 = vmatpush1.bf16.msra.mxu0 0
        %964 = vmatprep.subr.bf16.mxu0 0
        %965 = vmatpush1.bf16.msra.mxu0 0
        %966 = vmatprep.subr.bf16.mxu0 0
        %967 = vmatpush1.bf16.msra.mxu0 0
        %968 = vmatprep.subr.bf16.mxu0 0
        %969 = vmatpush1.bf16.msra.mxu0 0
        %970 = vmatprep.subr.bf16.mxu0 0
        %971 = vmatpush1.bf16.msra.mxu0 0
        %972 = vmatprep.subr.bf16.mxu0 0
        %973 = vmatpush1.bf16.msra.mxu0 0
        %974 = vmatprep.subr.bf16.mxu0 0
        %975 = vmatpush1.bf16.msra.mxu0 0
        %976 = vmatprep.subr.bf16.mxu0 0
        %977 = vmatpush1.bf16.msra.mxu0 0
        %978 = vmatprep.mubr.bf16.mxu0 0
        %979 = vmatmul.mubr.bf16.gmra.mrb[0].mxu0 %v945
        %v980 = vpop.f32.mrb[0].mxu0
        %v981 = vadd.f32 0.0, %v980
        %v982 = vpop.f32.mrb[0].mxu0
        %v983 = vadd.f32 0.0, %v982
        %v984 = vpop.f32.mrb[0].mxu0
        %v985 = vpop.f32.mrb[0].mxu0
        %986 = vdwg.mxu0
        %987 = vmatprep.subr.bf16.mxu0 %v592
        %988 = vmatpush1.bf16.msra.mxu0 %v591
        %989 = vmatprep.subr.bf16.mxu0 %v594
        %990 = vmatpush1.bf16.msra.mxu0 %v593
        %991 = vmatprep.subr.bf16.mxu0 %v596
        %992 = vmatpush1.bf16.msra.mxu0 %v595
        %993 = vmatprep.subr.bf16.mxu0 %v598
        %994 = vmatpush1.bf16.msra.mxu0 %v597
        %995 = vmatprep.subr.bf16.mxu0 %v600
        %996 = vmatpush1.bf16.msra.mxu0 %v599
        %997 = vmatprep.subr.bf16.mxu0 %v602
        %998 = vmatpush1.bf16.msra.mxu0 %v601
        %999 = vmatprep.subr.bf16.mxu0 %v604
        %1000 = vmatpush1.bf16.msra.mxu0 %v603
        %1001 = vmatprep.subr.bf16.mxu0 %v606
        %1002 = vmatpush1.bf16.msra.mxu0 %v605
        %1003 = vmatprep.subr.bf16.mxu0 0
        %1004 = vmatpush1.bf16.msra.mxu0 0
        %1005 = vmatprep.subr.bf16.mxu0 0
        %1006 = vmatpush1.bf16.msra.mxu0 0
        %1007 = vmatprep.subr.bf16.mxu0 0
        %1008 = vmatpush1.bf16.msra.mxu0 0
        %1009 = vmatprep.subr.bf16.mxu0 0
        %1010 = vmatpush1.bf16.msra.mxu0 0
        %1011 = vmatprep.subr.bf16.mxu0 0
        %1012 = vmatpush1.bf16.msra.mxu0 0
        %1013 = vmatprep.subr.bf16.mxu0 0
        %1014 = vmatpush1.bf16.msra.mxu0 0
        %1015 = vmatprep.subr.bf16.mxu0 0
        %1016 = vmatpush1.bf16.msra.mxu0 0
        %1017 = vmatprep.subr.bf16.mxu0 0
        %1018 = vmatpush1.bf16.msra.mxu0 0
        %1019 = vmatprep.mubr.bf16.mxu0 0
        %1020 = vmatmul.mubr.bf16.gmra.mrb[0].mxu0 %v607
        %v1021 = vpop.f32.mrb[0].mxu0
        %v1022 = vadd.f32 %v981, %v1021
        %v1023 = vpop.f32.mrb[0].mxu0
        %v1024 = vadd.f32 %v983, %v1023
        %v1025 = vpop.f32.mrb[0].mxu0
        %v1026 = vpop.f32.mrb[0].mxu0
        %1027 = vdwg.mxu0
        %v1028 = vld [vmem:[%s1 + $0x80] sm:$0xf]
        %v1029 = vld [vmem:[%s1 + $0x84] sm:$0xf]
        %v1030 = vld [vmem:[%s1 + $0x88] sm:$0xf]
        %v1031 = vld [vmem:[%s1 + $0x8c] sm:$0xf]
        %v1032 = vld [vmem:[%s1 + $0x90] sm:$0xf]
        %v1033 = vld [vmem:[%s1 + $0x94] sm:$0xf]
        %v1034 = vld [vmem:[%s1 + $0x98] sm:$0xf]
        %v1035 = vld [vmem:[%s1 + $0x9c] sm:$0xf]
        %v1036 = vld [vmem:[%s1 + $0xa0] sm:$0xf]
        %v1037 = vld [vmem:[%s1 + $0xa4] sm:$0xf]
        %v1038 = vld [vmem:[%s1 + $0xa8] sm:$0xf]
        %v1039 = vld [vmem:[%s1 + $0xac] sm:$0xf]
        %v1040 = vld [vmem:[%s1 + $0xb0] sm:$0xf]
        %v1041 = vld [vmem:[%s1 + $0xb4] sm:$0xf]
        %v1042 = vld [vmem:[%s1 + $0xb8] sm:$0xf]
        %v1043 = vld [vmem:[%s1 + $0xbc] sm:$0xf]
        %v1044 = vld [vmem:[%s2 + $0x100] sm:$0xff]
        %v1045 = vld [vmem:[%s2 + $0x108] sm:$0xff]
        %v1046 = vld [vmem:[%s2 + $0x110] sm:$0xff]
        %v1047 = vld [vmem:[%s2 + $0x118] sm:$0xff]
        %v1048 = vld [vmem:[%s2 + $0x120] sm:$0xff]
        %v1049 = vld [vmem:[%s2 + $0x128] sm:$0xff]
        %v1050 = vld [vmem:[%s2 + $0x130] sm:$0xff]
        %v1051 = vld [vmem:[%s2 + $0x138] sm:$0xff]
        %v1052 = vld [vmem:[%s2 + $0x140] sm:$0xff]
        %v1053 = vld [vmem:[%s2 + $0x148] sm:$0xff]
        %v1054 = vld [vmem:[%s2 + $0x150] sm:$0xff]
        %v1055 = vld [vmem:[%s2 + $0x158] sm:$0xff]
        %v1056 = vld [vmem:[%s2 + $0x160] sm:$0xff]
        %v1057 = vld [vmem:[%s2 + $0x168] sm:$0xff]
        %v1058 = vld [vmem:[%s2 + $0x170] sm:$0xff]
        %v1059 = vld [vmem:[%s2 + $0x178] sm:$0xff]
        %1061 = vset.pattern.permute.xlu0 0
        %1062 = vperm.xlu0 %1061, %v1044
        %v1063 = vpop.permute.xlu0 %1062
        %1066 = vset.pattern.permute.xlu0 0
        %1067 = vperm.xlu0 %1066, %v1045
        %v1068 = vpop.permute.xlu0 %1067
        %1071 = vset.pattern.permute.xlu0 0
        %1072 = vperm.xlu0 %1071, %v1046
        %v1073 = vpop.permute.xlu0 %1072
        %1076 = vset.pattern.permute.xlu0 0
        %1077 = vperm.xlu0 %1076, %v1047
        %v1078 = vpop.permute.xlu0 %1077
        %1081 = vset.pattern.permute.xlu0 0
        %1082 = vperm.xlu0 %1081, %v1048
        %v1083 = vpop.permute.xlu0 %1082
        %1086 = vset.pattern.permute.xlu0 0
        %1087 = vperm.xlu0 %1086, %v1049
        %v1088 = vpop.permute.xlu0 %1087
        %1091 = vset.pattern.permute.xlu0 0
        %1092 = vperm.xlu0 %1091, %v1050
        %v1093 = vpop.permute.xlu0 %1092
        %1096 = vset.pattern.permute.xlu0 0
        %1097 = vperm.xlu0 %1096, %v1051
        %v1098 = vpop.permute.xlu0 %1097
        %1101 = vset.pattern.permute.xlu0 0
        %1102 = vperm.xlu0 %1101, %v1052
        %v1103 = vpop.permute.xlu0 %1102
        %1106 = vset.pattern.permute.xlu0 0
        %1107 = vperm.xlu0 %1106, %v1053
        %v1108 = vpop.permute.xlu0 %1107
        %1111 = vset.pattern.permute.xlu0 0
        %1112 = vperm.xlu0 %1111, %v1054
        %v1113 = vpop.permute.xlu0 %1112
        %1116 = vset.pattern.permute.xlu0 0
        %1117 = vperm.xlu0 %1116, %v1055
        %v1118 = vpop.permute.xlu0 %1117
        %1121 = vset.pattern.permute.xlu0 0
        %1122 = vperm.xlu0 %1121, %v1056
        %v1123 = vpop.permute.xlu0 %1122
        %1126 = vset.pattern.permute.xlu0 0
        %1127 = vperm.xlu0 %1126, %v1057
        %v1128 = vpop.permute.xlu0 %1127
        %1131 = vset.pattern.permute.xlu0 0
        %1132 = vperm.xlu0 %1131, %v1058
        %v1133 = vpop.permute.xlu0 %1132
        %1136 = vset.pattern.permute.xlu0 0
        %1137 = vperm.xlu0 %1136, %v1059
        %v1138 = vpop.permute.xlu0 %1137
        %v1156 = vunpack.c.l.b16 %v1028
        %v1157 = vunpack.c.l.b16 %v1029
        %v1158 = vunpack.c.l.b16 %v1030
        %v1159 = vunpack.c.l.b16 %v1031
        %v1160 = vunpack.c.l.b16 %v1032
        %v1161 = vunpack.c.l.b16 %v1033
        %v1162 = vunpack.c.l.b16 %v1034
        %v1163 = vunpack.c.l.b16 %v1035
        %v1164 = vunpack.c.l.b16 %v1036
        %v1165 = vunpack.c.l.b16 %v1037
        %v1166 = vunpack.c.l.b16 %v1038
        %v1167 = vunpack.c.l.b16 %v1039
        %v1168 = vunpack.c.l.b16 %v1040
        %v1169 = vunpack.c.l.b16 %v1041
        %v1170 = vunpack.c.l.b16 %v1042
        %v1171 = vunpack.c.l.b16 %v1043
        %v1172 = vpack.c.b16 %v1157, %v1156
        %v1173 = vpack.c.b16 %v1159, %v1158
        %v1174 = vpack.c.b16 %v1161, %v1160
        %v1175 = vpack.c.b16 %v1163, %v1162
        %v1176 = vpack.c.b16 %v1165, %v1164
        %v1177 = vpack.c.b16 %v1167, %v1166
        %v1178 = vpack.c.b16 %v1169, %v1168
        %v1179 = vpack.c.b16 %v1171, %v1170
        %v1181 = vsel %vm414, %v1172, 0
        %v1184 = vsel %vm414, %v1173, 0
        %v1187 = vsel %vm414, %v1174, 0
        %v1190 = vsel %vm414, %v1175, 0
        %v1193 = vsel %vm414, %v1176, 0
        %v1196 = vsel %vm414, %v1177, 0
        %v1199 = vsel %vm414, %v1178, 0
        %v1202 = vsel %vm414, %v1179, 0
        %1204 = vmatprep.subr.bf16.mxu0 %v444
        %1205 = vmatpush1.bf16.msra.mxu0 %v441
        %1206 = vmatprep.subr.bf16.mxu0 0
        %1207 = vmatpush1.bf16.msra.mxu0 0
        %1208 = vmatprep.subr.bf16.mxu0 0
        %1209 = vmatpush1.bf16.msra.mxu0 0
        %1210 = vmatprep.subr.bf16.mxu0 0
        %1211 = vmatpush1.bf16.msra.mxu0 0
        %1212 = vmatprep.subr.bf16.mxu0 0
        %1213 = vmatpush1.bf16.msra.mxu0 0
        %1214 = vmatprep.subr.bf16.mxu0 0
        %1215 = vmatpush1.bf16.msra.mxu0 0
        %1216 = vmatprep.subr.bf16.mxu0 0
        %1217 = vmatpush1.bf16.msra.mxu0 0
        %1218 = vmatprep.subr.bf16.mxu0 0
        %1219 = vmatpush1.bf16.msra.mxu0 0
        %1220 = vmatprep.subr.bf16.mxu0 0
        %1221 = vmatpush1.bf16.msra.mxu0 0
        %1222 = vmatprep.subr.bf16.mxu0 0
        %1223 = vmatpush1.bf16.msra.mxu0 0
        %1224 = vmatprep.subr.bf16.mxu0 0
        %1225 = vmatpush1.bf16.msra.mxu0 0
        %1226 = vmatprep.subr.bf16.mxu0 0
        %1227 = vmatpush1.bf16.msra.mxu0 0
        %1228 = vmatprep.subr.bf16.mxu0 0
        %1229 = vmatpush1.bf16.msra.mxu0 0
        %1230 = vmatprep.subr.bf16.mxu0 0
        %1231 = vmatpush1.bf16.msra.mxu0 0
        %1232 = vmatprep.subr.bf16.mxu0 0
        %1233 = vmatpush1.bf16.msra.mxu0 0
        %1234 = vmatprep.subr.bf16.mxu0 0
        %1235 = vmatpush1.bf16.msra.mxu0 0
        %1236 = vmatprep.mubr.bf16.mxu0 0
        %1237 = vmatmul.mubr.bf16.gmra.mrb[0].mxu0 %v1181
        %v1238 = vpop.f32.mrb[0].mxu0
        %v1239 = vadd.f32 %v1063, %v1238
        %v1240 = vpop.f32.mrb[0].mxu0
        %v1241 = vadd.f32 %v1063, %v1240
        %v1242 = vpop.f32.mrb[0].mxu0
        %v1243 = vadd.f32 %v1068, %v1242
        %v1244 = vpop.f32.mrb[0].mxu0
        %v1245 = vadd.f32 %v1068, %v1244
        %1246 = vmatprep.mubr.bf16.mxu0 0
        %1247 = vmatmul.mubr.bf16.gmra.mrb[0].mxu0 %v1184
        %v1248 = vpop.f32.mrb[0].mxu0
        %v1249 = vadd.f32 %v1073, %v1248
        %v1250 = vpop.f32.mrb[0].mxu0
        %v1251 = vadd.f32 %v1073, %v1250
        %v1252 = vpop.f32.mrb[0].mxu0
        %v1253 = vadd.f32 %v1078, %v1252
        %v1254 = vpop.f32.mrb[0].mxu0
        %v1255 = vadd.f32 %v1078, %v1254
        %1256 = vmatprep.mubr.bf16.mxu0 0
        %1257 = vmatmul.mubr.bf16.gmra.mrb[0].mxu0 %v1187
        %v1258 = vpop.f32.mrb[0].mxu0
        %v1259 = vadd.f32 %v1083, %v1258
        %v1260 = vpop.f32.mrb[0].mxu0
        %v1261 = vadd.f32 %v1083, %v1260
        %v1262 = vpop.f32.mrb[0].mxu0
        %v1263 = vadd.f32 %v1088, %v1262
        %v1264 = vpop.f32.mrb[0].mxu0
        %v1265 = vadd.f32 %v1088, %v1264
        %1266 = vmatprep.mubr.bf16.mxu0 0
        %1267 = vmatmul.mubr.bf16.gmra.mrb[0].mxu0 %v1190
        %v1268 = vpop.f32.mrb[0].mxu0
        %v1269 = vadd.f32 %v1093, %v1268
        %v1270 = vpop.f32.mrb[0].mxu0
        %v1271 = vadd.f32 %v1093, %v1270
        %v1272 = vpop.f32.mrb[0].mxu0
        %v1273 = vadd.f32 %v1098, %v1272
        %v1274 = vpop.f32.mrb[0].mxu0
        %v1275 = vadd.f32 %v1098, %v1274
        %1276 = vmatprep.mubr.bf16.mxu0 0
        %1277 = vmatmul.mubr.bf16.gmra.mrb[0].mxu0 %v1193
        %v1278 = vpop.f32.mrb[0].mxu0
        %v1279 = vadd.f32 %v1103, %v1278
        %v1280 = vpop.f32.mrb[0].mxu0
        %v1281 = vadd.f32 %v1103, %v1280
        %v1282 = vpop.f32.mrb[0].mxu0
        %v1283 = vadd.f32 %v1108, %v1282
        %v1284 = vpop.f32.mrb[0].mxu0
        %v1285 = vadd.f32 %v1108, %v1284
        %1286 = vmatprep.mubr.bf16.mxu0 0
        %1287 = vmatmul.mubr.bf16.gmra.mrb[0].mxu0 %v1196
        %v1288 = vpop.f32.mrb[0].mxu0
        %v1289 = vadd.f32 %v1113, %v1288
        %v1290 = vpop.f32.mrb[0].mxu0
        %v1291 = vadd.f32 %v1113, %v1290
        %v1292 = vpop.f32.mrb[0].mxu0
        %v1293 = vadd.f32 %v1118, %v1292
        %v1294 = vpop.f32.mrb[0].mxu0
        %v1295 = vadd.f32 %v1118, %v1294
        %1296 = vmatprep.mubr.bf16.mxu0 0
        %1297 = vmatmul.mubr.bf16.gmra.mrb[0].mxu0 %v1199
        %v1298 = vpop.f32.mrb[0].mxu0
        %v1299 = vadd.f32 %v1123, %v1298
        %v1300 = vpop.f32.mrb[0].mxu0
        %v1301 = vadd.f32 %v1123, %v1300
        %v1302 = vpop.f32.mrb[0].mxu0
        %v1303 = vadd.f32 %v1128, %v1302
        %v1304 = vpop.f32.mrb[0].mxu0
        %v1305 = vadd.f32 %v1128, %v1304
        %1306 = vmatprep.mubr.bf16.mxu0 0
        %1307 = vmatmul.mubr.bf16.gmra.mrb[0].mxu0 %v1202
        %v1308 = vpop.f32.mrb[0].mxu0
        %v1309 = vadd.f32 %v1133, %v1308
        %v1310 = vpop.f32.mrb[0].mxu0
        %v1311 = vadd.f32 %v1133, %v1310
        %v1312 = vpop.f32.mrb[0].mxu0
        %v1313 = vadd.f32 %v1138, %v1312
        %v1314 = vpop.f32.mrb[0].mxu0
        %v1315 = vadd.f32 %v1138, %v1314
        %1316 = vdwg.mxu0
        %v1317 = vmax.f32 %v1239, 0.0
        %v1318 = vmax.f32 %v1241, 0.0
        %v1319 = vmax.f32 %v1243, 0.0
        %v1320 = vmax.f32 %v1245, 0.0
        %v1321 = vmax.f32 %v1249, 0.0
        %v1322 = vmax.f32 %v1251, 0.0
        %v1323 = vmax.f32 %v1253, 0.0
        %v1324 = vmax.f32 %v1255, 0.0
        %v1325 = vmax.f32 %v1259, 0.0
        %v1326 = vmax.f32 %v1261, 0.0
        %v1327 = vmax.f32 %v1263, 0.0
        %v1328 = vmax.f32 %v1265, 0.0
        %v1329 = vmax.f32 %v1269, 0.0
        %v1330 = vmax.f32 %v1271, 0.0
        %v1331 = vmax.f32 %v1273, 0.0
        %v1332 = vmax.f32 %v1275, 0.0
        %v1333 = vmax.f32 %v1279, 0.0
        %v1334 = vmax.f32 %v1281, 0.0
        %v1335 = vmax.f32 %v1283, 0.0
        %v1336 = vmax.f32 %v1285, 0.0
        %v1337 = vmax.f32 %v1289, 0.0
        %v1338 = vmax.f32 %v1291, 0.0
        %v1339 = vmax.f32 %v1293, 0.0
        %v1340 = vmax.f32 %v1295, 0.0
        %v1341 = vmax.f32 %v1299, 0.0
        %v1342 = vmax.f32 %v1301, 0.0
        %v1343 = vmax.f32 %v1303, 0.0
        %v1344 = vmax.f32 %v1305, 0.0
        %v1345 = vmax.f32 %v1309, 0.0
        %v1346 = vmax.f32 %v1311, 0.0
        %v1347 = vmax.f32 %v1313, 0.0
        %v1348 = vmax.f32 %v1315, 0.0
        %v1349 = vpack.c.bf16 %v1319, %v1317
        %v1350 = vpack.c.bf16 %v1320, %v1318
        %v1351 = vpack.c.bf16 %v1323, %v1321
        %v1352 = vpack.c.bf16 %v1324, %v1322
        %v1353 = vpack.c.bf16 %v1327, %v1325
        %v1354 = vpack.c.bf16 %v1328, %v1326
        %v1355 = vpack.c.bf16 %v1331, %v1329
        %v1356 = vpack.c.bf16 %v1332, %v1330
        %v1357 = vpack.c.bf16 %v1335, %v1333
        %v1358 = vpack.c.bf16 %v1336, %v1334
        %v1359 = vpack.c.bf16 %v1339, %v1337
        %v1360 = vpack.c.bf16 %v1340, %v1338
        %v1361 = vpack.c.bf16 %v1343, %v1341
        %v1362 = vpack.c.bf16 %v1344, %v1342
        %v1363 = vpack.c.bf16 %v1347, %v1345
        %v1364 = vpack.c.bf16 %v1348, %v1346
        %v1365 = vld [vmem:[%s3 + $0x2] sm:$0x1]
        %1366 = vmatprep.subr.bf16.mxu0 %v1350
        %1367 = vmatpush1.bf16.msra.mxu0 %v1349
        %1368 = vmatprep.subr.bf16.mxu0 %v1352
        %1369 = vmatpush1.bf16.msra.mxu0 %v1351
        %1370 = vmatprep.subr.bf16.mxu0 %v1354
        %1371 = vmatpush1.bf16.msra.mxu0 %v1353
        %1372 = vmatprep.subr.bf16.mxu0 %v1356
        %1373 = vmatpush1.bf16.msra.mxu0 %v1355
        %1374 = vmatprep.subr.bf16.mxu0 %v1358
        %1375 = vmatpush1.bf16.msra.mxu0 %v1357
        %1376 = vmatprep.subr.bf16.mxu0 %v1360
        %1377 = vmatpush1.bf16.msra.mxu0 %v1359
        %1378 = vmatprep.subr.bf16.mxu0 %v1362
        %1379 = vmatpush1.bf16.msra.mxu0 %v1361
        %1380 = vmatprep.subr.bf16.mxu0 %v1364
        %1381 = vmatpush1.bf16.msra.mxu0 %v1363
        %1382 = vmatprep.subr.bf16.mxu0 0
        %1383 = vmatpush1.bf16.msra.mxu0 0
        %1384 = vmatprep.subr.bf16.mxu0 0
        %1385 = vmatpush1.bf16.msra.mxu0 0
        %1386 = vmatprep.subr.bf16.mxu0 0
        %1387 = vmatpush1.bf16.msra.mxu0 0
        %1388 = vmatprep.subr.bf16.mxu0 0
        %1389 = vmatpush1.bf16.msra.mxu0 0
        %1390 = vmatprep.subr.bf16.mxu0 0
        %1391 = vmatpush1.bf16.msra.mxu0 0
        %1392 = vmatprep.subr.bf16.mxu0 0
        %1393 = vmatpush1.bf16.msra.mxu0 0
        %1394 = vmatprep.subr.bf16.mxu0 0
        %1395 = vmatpush1.bf16.msra.mxu0 0
        %1396 = vmatprep.subr.bf16.mxu0 0
        %1397 = vmatpush1.bf16.msra.mxu0 0
        %1398 = vmatprep.mubr.bf16.mxu0 0
        %1399 = vmatmul.mubr.bf16.gmra.mrb[0].mxu0 %v1365
        %v1400 = vpop.f32.mrb[0].mxu0
        %v1401 = vadd.f32 0.0, %v1400
        %v1402 = vpop.f32.mrb[0].mxu0
        %v1403 = vadd.f32 0.0, %v1402
        %v1404 = vpop.f32.mrb[0].mxu0
        %v1405 = vpop.f32.mrb[0].mxu0
        %1406 = vdwg.mxu0
        %v1407 = vadd.f32 %v1022, %v1401
        %v1408 = vadd.f32 %v1024, %v1403
        %v1409 = vld [vmem:[%s1 + $0xc0] sm:$0xf]
        %v1410 = vld [vmem:[%s1 + $0xc4] sm:$0xf]
        %v1411 = vld [vmem:[%s1 + $0xc8] sm:$0xf]
        %v1412 = vld [vmem:[%s1 + $0xcc] sm:$0xf]
        %v1413 = vld [vmem:[%s1 + $0xd0] sm:$0xf]
        %v1414 = vld [vmem:[%s1 + $0xd4] sm:$0xf]
        %v1415 = vld [vmem:[%s1 + $0xd8] sm:$0xf]
        %v1416 = vld [vmem:[%s1 + $0xdc] sm:$0xf]
        %v1417 = vld [vmem:[%s1 + $0xe0] sm:$0xf]
        %v1418 = vld [vmem:[%s1 + $0xe4] sm:$0xf]
        %v1419 = vld [vmem:[%s1 + $0xe8] sm:$0xf]
        %v1420 = vld [vmem:[%s1 + $0xec] sm:$0xf]
        %v1421 = vld [vmem:[%s1 + $0xf0] sm:$0xf]
        %v1422 = vld [vmem:[%s1 + $0xf4] sm:$0xf]
        %v1423 = vld [vmem:[%s1 + $0xf8] sm:$0xf]
        %v1424 = vld [vmem:[%s1 + $0xfc] sm:$0xf]
        %v1425 = vld [vmem:[%s2 + $0x180] sm:$0xff]
        %v1426 = vld [vmem:[%s2 + $0x188] sm:$0xff]
        %v1427 = vld [vmem:[%s2 + $0x190] sm:$0xff]
        %v1428 = vld [vmem:[%s2 + $0x198] sm:$0xff]
        %v1429 = vld [vmem:[%s2 + $0x1a0] sm:$0xff]
        %v1430 = vld [vmem:[%s2 + $0x1a8] sm:$0xff]
        %v1431 = vld [vmem:[%s2 + $0x1b0] sm:$0xff]
        %v1432 = vld [vmem:[%s2 + $0x1b8] sm:$0xff]
        %v1433 = vld [vmem:[%s2 + $0x1c0] sm:$0xff]
        %v1434 = vld [vmem:[%s2 + $0x1c8] sm:$0xff]
        %v1435 = vld [vmem:[%s2 + $0x1d0] sm:$0xff]
        %v1436 = vld [vmem:[%s2 + $0x1d8] sm:$0xff]
        %v1437 = vld [vmem:[%s2 + $0x1e0] sm:$0xff]
        %v1438 = vld [vmem:[%s2 + $0x1e8] sm:$0xff]
        %v1439 = vld [vmem:[%s2 + $0x1f0] sm:$0xff]
        %v1440 = vld [vmem:[%s2 + $0x1f8] sm:$0xff]
        %1442 = vset.pattern.permute.xlu0 0
        %1443 = vperm.xlu0 %1442, %v1425
        %v1444 = vpop.permute.xlu0 %1443
        %1447 = vset.pattern.permute.xlu0 0
        %1448 = vperm.xlu0 %1447, %v1426
        %v1449 = vpop.permute.xlu0 %1448
        %1452 = vset.pattern.permute.xlu0 0
        %1453 = vperm.xlu0 %1452, %v1427
        %v1454 = vpop.permute.xlu0 %1453
        %1457 = vset.pattern.permute.xlu0 0
        %1458 = vperm.xlu0 %1457, %v1428
        %v1459 = vpop.permute.xlu0 %1458
        %1462 = vset.pattern.permute.xlu0 0
        %1463 = vperm.xlu0 %1462, %v1429
        %v1464 = vpop.permute.xlu0 %1463
        %1467 = vset.pattern.permute.xlu0 0
        %1468 = vperm.xlu0 %1467, %v1430
        %v1469 = vpop.permute.xlu0 %1468
        %1472 = vset.pattern.permute.xlu0 0
        %1473 = vperm.xlu0 %1472, %v1431
        %v1474 = vpop.permute.xlu0 %1473
        %1477 = vset.pattern.permute.xlu0 0
        %1478 = vperm.xlu0 %1477, %v1432
        %v1479 = vpop.permute.xlu0 %1478
        %1482 = vset.pattern.permute.xlu0 0
        %1483 = vperm.xlu0 %1482, %v1433
        %v1484 = vpop.permute.xlu0 %1483
        %1487 = vset.pattern.permute.xlu0 0
        %1488 = vperm.xlu0 %1487, %v1434
        %v1489 = vpop.permute.xlu0 %1488
        %1492 = vset.pattern.permute.xlu0 0
        %1493 = vperm.xlu0 %1492, %v1435
        %v1494 = vpop.permute.xlu0 %1493
        %1497 = vset.pattern.permute.xlu0 0
        %1498 = vperm.xlu0 %1497, %v1436
        %v1499 = vpop.permute.xlu0 %1498
        %1502 = vset.pattern.permute.xlu0 0
        %1503 = vperm.xlu0 %1502, %v1437
        %v1504 = vpop.permute.xlu0 %1503
        %1507 = vset.pattern.permute.xlu0 0
        %1508 = vperm.xlu0 %1507, %v1438
        %v1509 = vpop.permute.xlu0 %1508
        %1512 = vset.pattern.permute.xlu0 0
        %1513 = vperm.xlu0 %1512, %v1439
        %v1514 = vpop.permute.xlu0 %1513
        %1517 = vset.pattern.permute.xlu0 0
        %1518 = vperm.xlu0 %1517, %v1440
        %v1519 = vpop.permute.xlu0 %1518
        %v1537 = vunpack.c.l.b16 %v1409
        %v1538 = vunpack.c.l.b16 %v1410
        %v1539 = vunpack.c.l.b16 %v1411
        %v1540 = vunpack.c.l.b16 %v1412
        %v1541 = vunpack.c.l.b16 %v1413
        %v1542 = vunpack.c.l.b16 %v1414
        %v1543 = vunpack.c.l.b16 %v1415
        %v1544 = vunpack.c.l.b16 %v1416
        %v1545 = vunpack.c.l.b16 %v1417
        %v1546 = vunpack.c.l.b16 %v1418
        %v1547 = vunpack.c.l.b16 %v1419
        %v1548 = vunpack.c.l.b16 %v1420
        %v1549 = vunpack.c.l.b16 %v1421
        %v1550 = vunpack.c.l.b16 %v1422
        %v1551 = vunpack.c.l.b16 %v1423
        %v1552 = vunpack.c.l.b16 %v1424
        %v1553 = vpack.c.b16 %v1538, %v1537
        %v1554 = vpack.c.b16 %v1540, %v1539
        %v1555 = vpack.c.b16 %v1542, %v1541
        %v1556 = vpack.c.b16 %v1544, %v1543
        %v1557 = vpack.c.b16 %v1546, %v1545
        %v1558 = vpack.c.b16 %v1548, %v1547
        %v1559 = vpack.c.b16 %v1550, %v1549
        %v1560 = vpack.c.b16 %v1552, %v1551
        %v1562 = vsel %vm414, %v1553, 0
        %v1565 = vsel %vm414, %v1554, 0
        %v1568 = vsel %vm414, %v1555, 0
        %v1571 = vsel %vm414, %v1556, 0
        %v1574 = vsel %vm414, %v1557, 0
        %v1577 = vsel %vm414, %v1558, 0
        %v1580 = vsel %vm414, %v1559, 0
        %v1583 = vsel %vm414, %v1560, 0
        %1585 = vmatprep.subr.bf16.mxu0 %v444
        %1586 = vmatpush1.bf16.msra.mxu0 %v441
        %1587 = vmatprep.subr.bf16.mxu0 0
        %1588 = vmatpush1.bf16.msra.mxu0 0
        %1589 = vmatprep.subr.bf16.mxu0 0
        %1590 = vmatpush1.bf16.msra.mxu0 0
        %1591 = vmatprep.subr.bf16.mxu0 0
        %1592 = vmatpush1.bf16.msra.mxu0 0
        %1593 = vmatprep.subr.bf16.mxu0 0
        %1594 = vmatpush1.bf16.msra.mxu0 0
        %1595 = vmatprep.subr.bf16.mxu0 0
        %1596 = vmatpush1.bf16.msra.mxu0 0
        %1597 = vmatprep.subr.bf16.mxu0 0
        %1598 = vmatpush1.bf16.msra.mxu0 0
        %1599 = vmatprep.subr.bf16.mxu0 0
        %1600 = vmatpush1.bf16.msra.mxu0 0
        %1601 = vmatprep.subr.bf16.mxu0 0
        %1602 = vmatpush1.bf16.msra.mxu0 0
        %1603 = vmatprep.subr.bf16.mxu0 0
        %1604 = vmatpush1.bf16.msra.mxu0 0
        %1605 = vmatprep.subr.bf16.mxu0 0
        %1606 = vmatpush1.bf16.msra.mxu0 0
        %1607 = vmatprep.subr.bf16.mxu0 0
        %1608 = vmatpush1.bf16.msra.mxu0 0
        %1609 = vmatprep.subr.bf16.mxu0 0
        %1610 = vmatpush1.bf16.msra.mxu0 0
        %1611 = vmatprep.subr.bf16.mxu0 0
        %1612 = vmatpush1.bf16.msra.mxu0 0
        %1613 = vmatprep.subr.bf16.mxu0 0
        %1614 = vmatpush1.bf16.msra.mxu0 0
        %1615 = vmatprep.subr.bf16.mxu0 0
        %1616 = vmatpush1.bf16.msra.mxu0 0
        %1617 = vmatprep.mubr.bf16.mxu0 0
        %1618 = vmatmul.mubr.bf16.gmra.mrb[0].mxu0 %v1562
        %v1619 = vpop.f32.mrb[0].mxu0
        %v1620 = vadd.f32 %v1444, %v1619
        %v1621 = vpop.f32.mrb[0].mxu0
        %v1622 = vadd.f32 %v1444, %v1621
        %v1623 = vpop.f32.mrb[0].mxu0
        %v1624 = vadd.f32 %v1449, %v1623
        %v1625 = vpop.f32.mrb[0].mxu0
        %v1626 = vadd.f32 %v1449, %v1625
        %1627 = vmatprep.mubr.bf16.mxu0 0
        %1628 = vmatmul.mubr.bf16.gmra.mrb[0].mxu0 %v1565
        %v1629 = vpop.f32.mrb[0].mxu0
        %v1630 = vadd.f32 %v1454, %v1629
        %v1631 = vpop.f32.mrb[0].mxu0
        %v1632 = vadd.f32 %v1454, %v1631
        %v1633 = vpop.f32.mrb[0].mxu0
        %v1634 = vadd.f32 %v1459, %v1633
        %v1635 = vpop.f32.mrb[0].mxu0
        %v1636 = vadd.f32 %v1459, %v1635
        %1637 = vmatprep.mubr.bf16.mxu0 0
        %1638 = vmatmul.mubr.bf16.gmra.mrb[0].mxu0 %v1568
        %v1639 = vpop.f32.mrb[0].mxu0
        %v1640 = vadd.f32 %v1464, %v1639
        %v1641 = vpop.f32.mrb[0].mxu0
        %v1642 = vadd.f32 %v1464, %v1641
        %v1643 = vpop.f32.mrb[0].mxu0
        %v1644 = vadd.f32 %v1469, %v1643
        %v1645 = vpop.f32.mrb[0].mxu0
        %v1646 = vadd.f32 %v1469, %v1645
        %1647 = vmatprep.mubr.bf16.mxu0 0
        %1648 = vmatmul.mubr.bf16.gmra.mrb[0].mxu0 %v1571
        %v1649 = vpop.f32.mrb[0].mxu0
        %v1650 = vadd.f32 %v1474, %v1649
        %v1651 = vpop.f32.mrb[0].mxu0
        %v1652 = vadd.f32 %v1474, %v1651
        %v1653 = vpop.f32.mrb[0].mxu0
        %v1654 = vadd.f32 %v1479, %v1653
        %v1655 = vpop.f32.mrb[0].mxu0
        %v1656 = vadd.f32 %v1479, %v1655
        %1657 = vmatprep.mubr.bf16.mxu0 0
        %1658 = vmatmul.mubr.bf16.gmra.mrb[0].mxu0 %v1574
        %v1659 = vpop.f32.mrb[0].mxu0
        %v1660 = vadd.f32 %v1484, %v1659
        %v1661 = vpop.f32.mrb[0].mxu0
        %v1662 = vadd.f32 %v1484, %v1661
        %v1663 = vpop.f32.mrb[0].mxu0
        %v1664 = vadd.f32 %v1489, %v1663
        %v1665 = vpop.f32.mrb[0].mxu0
        %v1666 = vadd.f32 %v1489, %v1665
        %1667 = vmatprep.mubr.bf16.mxu0 0
        %1668 = vmatmul.mubr.bf16.gmra.mrb[0].mxu0 %v1577
        %v1669 = vpop.f32.mrb[0].mxu0
        %v1670 = vadd.f32 %v1494, %v1669
        %v1671 = vpop.f32.mrb[0].mxu0
        %v1672 = vadd.f32 %v1494, %v1671
        %v1673 = vpop.f32.mrb[0].mxu0
        %v1674 = vadd.f32 %v1499, %v1673
        %v1675 = vpop.f32.mrb[0].mxu0
        %v1676 = vadd.f32 %v1499, %v1675
        %1677 = vmatprep.mubr.bf16.mxu0 0
        %1678 = vmatmul.mubr.bf16.gmra.mrb[0].mxu0 %v1580
        %v1679 = vpop.f32.mrb[0].mxu0
        %v1680 = vadd.f32 %v1504, %v1679
        %v1681 = vpop.f32.mrb[0].mxu0
        %v1682 = vadd.f32 %v1504, %v1681
        %v1683 = vpop.f32.mrb[0].mxu0
        %v1684 = vadd.f32 %v1509, %v1683
        %v1685 = vpop.f32.mrb[0].mxu0
        %v1686 = vadd.f32 %v1509, %v1685
        %1687 = vmatprep.mubr.bf16.mxu0 0
        %1688 = vmatmul.mubr.bf16.gmra.mrb[0].mxu0 %v1583
        %v1689 = vpop.f32.mrb[0].mxu0
        %v1690 = vadd.f32 %v1514, %v1689
        %v1691 = vpop.f32.mrb[0].mxu0
        %v1692 = vadd.f32 %v1514, %v1691
        %v1693 = vpop.f32.mrb[0].mxu0
        %v1694 = vadd.f32 %v1519, %v1693
        %v1695 = vpop.f32.mrb[0].mxu0
        %v1696 = vadd.f32 %v1519, %v1695
        %1697 = vdwg.mxu0
        %v1698 = vmax.f32 %v1620, 0.0
        %v1699 = vmax.f32 %v1622, 0.0
        %v1700 = vmax.f32 %v1624, 0.0
        %v1701 = vmax.f32 %v1626, 0.0
        %v1702 = vmax.f32 %v1630, 0.0
        %v1703 = vmax.f32 %v1632, 0.0
        %v1704 = vmax.f32 %v1634, 0.0
        %v1705 = vmax.f32 %v1636, 0.0
        %v1706 = vmax.f32 %v1640, 0.0
        %v1707 = vmax.f32 %v1642, 0.0
        %v1708 = vmax.f32 %v1644, 0.0
        %v1709 = vmax.f32 %v1646, 0.0
        %v1710 = vmax.f32 %v1650, 0.0
        %v1711 = vmax.f32 %v1652, 0.0
        %v1712 = vmax.f32 %v1654, 0.0
        %v1713 = vmax.f32 %v1656, 0.0
        %v1714 = vmax.f32 %v1660, 0.0
        %v1715 = vmax.f32 %v1662, 0.0
        %v1716 = vmax.f32 %v1664, 0.0
        %v1717 = vmax.f32 %v1666, 0.0
        %v1718 = vmax.f32 %v1670, 0.0
        %v1719 = vmax.f32 %v1672, 0.0
        %v1720 = vmax.f32 %v1674, 0.0
        %v1721 = vmax.f32 %v1676, 0.0
        %v1722 = vmax.f32 %v1680, 0.0
        %v1723 = vmax.f32 %v1682, 0.0
        %v1724 = vmax.f32 %v1684, 0.0
        %v1725 = vmax.f32 %v1686, 0.0
        %v1726 = vmax.f32 %v1690, 0.0
        %v1727 = vmax.f32 %v1692, 0.0
        %v1728 = vmax.f32 %v1694, 0.0
        %v1729 = vmax.f32 %v1696, 0.0
        %v1730 = vpack.c.bf16 %v1700, %v1698
        %v1731 = vpack.c.bf16 %v1701, %v1699
        %v1732 = vpack.c.bf16 %v1704, %v1702
        %v1733 = vpack.c.bf16 %v1705, %v1703
        %v1734 = vpack.c.bf16 %v1708, %v1706
        %v1735 = vpack.c.bf16 %v1709, %v1707
        %v1736 = vpack.c.bf16 %v1712, %v1710
        %v1737 = vpack.c.bf16 %v1713, %v1711
        %v1738 = vpack.c.bf16 %v1716, %v1714
        %v1739 = vpack.c.bf16 %v1717, %v1715
        %v1740 = vpack.c.bf16 %v1720, %v1718
        %v1741 = vpack.c.bf16 %v1721, %v1719
        %v1742 = vpack.c.bf16 %v1724, %v1722
        %v1743 = vpack.c.bf16 %v1725, %v1723
        %v1744 = vpack.c.bf16 %v1728, %v1726
        %v1745 = vpack.c.bf16 %v1729, %v1727
        %v1746 = vld [vmem:[%s3 + $0x3] sm:$0x1]
        %1747 = vmatprep.subr.bf16.mxu0 %v1731
        %1748 = vmatpush1.bf16.msra.mxu0 %v1730
        %1749 = vmatprep.subr.bf16.mxu0 %v1733
        %1750 = vmatpush1.bf16.msra.mxu0 %v1732
        %1751 = vmatprep.subr.bf16.mxu0 %v1735
        %1752 = vmatpush1.bf16.msra.mxu0 %v1734
        %1753 = vmatprep.subr.bf16.mxu0 %v1737
        %1754 = vmatpush1.bf16.msra.mxu0 %v1736
        %1755 = vmatprep.subr.bf16.mxu0 %v1739
        %1756 = vmatpush1.bf16.msra.mxu0 %v1738
        %1757 = vmatprep.subr.bf16.mxu0 %v1741
        %1758 = vmatpush1.bf16.msra.mxu0 %v1740
        %1759 = vmatprep.subr.bf16.mxu0 %v1743
        %1760 = vmatpush1.bf16.msra.mxu0 %v1742
        %1761 = vmatprep.subr.bf16.mxu0 %v1745
        %1762 = vmatpush1.bf16.msra.mxu0 %v1744
        %1763 = vmatprep.subr.bf16.mxu0 0
        %1764 = vmatpush1.bf16.msra.mxu0 0
        %1765 = vmatprep.subr.bf16.mxu0 0
        %1766 = vmatpush1.bf16.msra.mxu0 0
        %1767 = vmatprep.subr.bf16.mxu0 0
        %1768 = vmatpush1.bf16.msra.mxu0 0
        %1769 = vmatprep.subr.bf16.mxu0 0
        %1770 = vmatpush1.bf16.msra.mxu0 0
        %1771 = vmatprep.subr.bf16.mxu0 0
        %1772 = vmatpush1.bf16.msra.mxu0 0
        %1773 = vmatprep.subr.bf16.mxu0 0
        %1774 = vmatpush1.bf16.msra.mxu0 0
        %1775 = vmatprep.subr.bf16.mxu0 0
        %1776 = vmatpush1.bf16.msra.mxu0 0
        %1777 = vmatprep.subr.bf16.mxu0 0
        %1778 = vmatpush1.bf16.msra.mxu0 0
        %1779 = vmatprep.mubr.bf16.mxu0 0
        %1780 = vmatmul.mubr.bf16.gmra.mrb[0].mxu0 %v1746
        %v1781 = vpop.f32.mrb[0].mxu0
        %v1782 = vadd.f32 0.0, %v1781
        %v1783 = vpop.f32.mrb[0].mxu0
        %v1784 = vadd.f32 0.0, %v1783
        %v1785 = vpop.f32.mrb[0].mxu0
        %v1786 = vpop.f32.mrb[0].mxu0
        %1787 = vdwg.mxu0
        %v1788 = vadd.f32 %v1407, %v1782
        %v1789 = vadd.f32 %v1408, %v1784
        %s1790 = sld [smem:[#allocation2]]
        %v1791 = vstv %s1790
        %v1792 = vadd.f32 %v1788, %v1791
        %v1793 = vadd.f32 %v1789, %v1791
        %v1796 = vcombine.low %v1792, %v1793
        %v1798 = vunpack.c.l.s4 1966171168
        %v1799 = vunpack.c.0.s8 %v1798
        %v1800 = vlaneseq
        %v1801 = vshrl.u32 %v1800, 7
        %v1802 = vsub.s32 %v1799, %v1801
        %v1803 = vrot.slane %v1796, %v1802
        %v1805 = vunpack.c.l.s4 1966171168
        %v1806 = vunpack.c.0.s8 %v1805
        %v1807 = vlaneseq
        %v1808 = vshrl.u32 %v1807, 7
        %v1809 = vsub.s32 %v1806, %v1808
        %v1810 = vrot.slane %v1803, %v1809
        %v1812 = vlaneseq
        %vm1813 = vcmp.ge.s32.totalorder %v1812, 0
        %vm1814 = vcmp.lt.s32.totalorder %v1812, 256
        %vm1815 = vmand %vm1813, %vm1814
        %1816 = vst.msk [vmem:[%s243] sm:$0x3] %vm1815, %v1810
        %s1817 = sand.u32 %s154, 1
        %s1818 = scalar_lea.sflag [#allocation4], %s1817
        %s1819 = sand.u32 %s154, 1
        %s1820 = smul.addr %s1819, 2
        %s1821 = scalar_lea.vmem [#allocation3], %s1820
        // Predicated region
        $region41: #{tpu_custom_call.1} parent=39 // pred_check
          %p1822 = pneg %p164
        $region42: #{tpu_custom_call.1} parent=39 // pred_check_branch
          %1824 = sbr.rel (%p1822) target = $region44
        $region43: #{tpu_custom_call.1} parent=39 // pred_region
          %s1825 = smul.u32 2, %s25
          %s1827 = ssub.s32 32, 32
          %1828 = vsyncadd %s1818, %s1827
          %s1829 = smul.addr %s24, 2
          %s1830 = sadd.s32 %s1825, %s1829
          %s1831 = smul.addr %s1830, 16
          %s1832 = scalar_lea.hbm %s5, %s1831
          %s1834 = sshll.u32 %s1821, 4
          %s1835 = int_to_ptr.vmem [resolvable:$true] %s1834
          %1837 = dma.vmem_to_hbm [thread:$0]  %s1835, 32, %s1832, %s1818
        $region44: #{tpu_custom_call.1} parent=39 // pred_fallthru
          _
      $region40: #{tpu_custom_call.1} parent=5 // pred_fallthru
        _
      %p1838 = scmp.le.s32.totalorder 2, %s15
      // Predicated region
      $region45: #{tpu_custom_call.1} parent=5 // pred_check
        %p1839 = pneg %p1838
      $region46: #{tpu_custom_call.1} parent=5 // pred_check_branch
        %1841 = sbr.rel (%p1839) target = $region48
      $region47: #{tpu_custom_call.1} parent=5 // pred_region
        %s1842 = ssub.s32 %s15, 2
        // Predicated region
        $region49: #{tpu_custom_call.1} parent=47 // pred_check
          %p1843 = pneg %p170
        $region50: #{tpu_custom_call.1} parent=47 // pred_check_branch
          %1845 = sbr.rel (%p1843) target = $region52
        $region51: #{tpu_custom_call.1} parent=47 // pred_region
          %s1846 = sand.u32 %s155, 1
          %s1847 = scalar_lea.sflag [#allocation4], %s1846
          %s1848 = sand.u32 %s155, 1
          %s1849 = smul.addr %s1848, 2
          %s1850 = scalar_lea.vmem [#allocation3], %s1849
          %1851 = dma.done %s1847, 32
        $region52: #{tpu_custom_call.1} parent=47 // pred_fallthru
          _
      $region48: #{tpu_custom_call.1} parent=5 // pred_fallthru
        _
    $region6: #{tpu_custom_call.1} parent=1 // loop_footer
      %s19 = sadd.s32 1, %s15
    $region7: #{tpu_custom_call.1} parent=1 // loop_footer_branch
      %14 = sbr.rel target = $region3
    $region8: #{tpu_custom_call.1} parent=1 // loop_exit
      _
    %1852 = vsyncpa [#allocation4], 1
    %s1853 = scalar_lea.sflag [#allocation4], 1
    %1854 = vsyncpa %s1853, 1

</llo_original>
